<compile_context>
chip_gen: v7x
topology: tpu7x:2x2x1
jax: 0.10.0
libtpu: 0.0.40
codegen_flags: <defaults>
</compile_context>

<pallas_src>
import jax
import jax.numpy as jnp
from jax.experimental import pallas as pl
from jax.experimental.pallas import tpu as pltpu


def _conv3x3_tap_fused(slab, w_ref, n_out):
    """3x3 'same' convolution over a column-padded slab.

    slab : (R, W+2, Cin) bf16 activations, columns already zero-padded by 1.
    w_ref: (3, 3*Cin, Cout) weights ref, layout [dy, dx*Cin + c, cout].
    Returns (n_out, W, Cout) f32; output row j reads slab rows j .. j+2
    (so R must equal n_out + 2).
    """
    W = slab.shape[1] - 2
    # Fuse the three dx taps along the contraction (lane) axis: K = 3*Cin.
    big = jnp.concatenate(
        [slab[:, 0:W, :], slab[:, 1:W + 1, :], slab[:, 2:W + 2, :]], axis=-1)
    acc = jnp.einsum('rwk,kp->rwp', big[0:n_out], w_ref[0],
                     preferred_element_type=jnp.float32)
    acc = acc + jnp.einsum('rwk,kp->rwp', big[1:n_out + 1], w_ref[1],
                           preferred_element_type=jnp.float32)
    acc = acc + jnp.einsum('rwk,kp->rwp', big[2:n_out + 2], w_ref[2],
                           preferred_element_type=jnp.float32)
    return acc


def _basic_block_kernel(xp_ref, w1_ref, s1_ref, b1_ref, w2_ref, s2_ref, b2_ref,
                        o_ref):
    # xp_ref : (1, H+4, W+2, C) bf16  input, rows zero-padded by 2, cols by 1
    # w1_ref : (3, 3C, P) bf16        conv1 weights, dx-fused per dy tap
    # s1/b1  : (1, P) f32             folded BN1 scale / bias
    # w2_ref : (3, 3P, P) bf16        conv2 weights, dx-fused per dy tap
    # s2/b2  : (1, P) f32             folded BN2 scale / bias
    # o_ref  : (1, TH, W, P) f32      output row tile (NHWC)
    TH = o_ref.shape[1]
    W = o_ref.shape[2]
    H = xp_ref.shape[1] - 4
    TE = TH + 2                       # conv1 rows incl. 1-row halo each side

    rt = pl.program_id(1)
    r0 = pl.multiple_of(rt * TH, TH)  # first output row of this tile

    # Input rows needed to recompute the conv1 intermediate (with halo) locally.
    slab = xp_ref[0, pl.ds(r0, TH + 4), :, :]              # (TH+4, W+2, C) bf16

    # ---- conv1 (+ folded BN1 + ReLU), on TE = TH+2 rows ----
    acc1 = _conv3x3_tap_fused(slab, w1_ref, TE)            # (TE, W, P) f32
    out1 = jnp.maximum(acc1 * s1_ref[...] + b1_ref[...], 0.0)

    # Rows of the intermediate that fall outside the image are conv2's zero
    # padding: mask them (only affects the first / last row tile).
    t = jax.lax.broadcasted_iota(jnp.int32, (TE, 1, 1), 0)
    row = r0 + t - 1
    valid = jnp.logical_and(row >= 0, row < H)
    mid = jnp.where(valid, out1, 0.0).astype(slab.dtype)   # (TE, W, P) bf16

    # ---- conv2 (+ folded BN2) on the column-padded intermediate ----
    zcol = jnp.zeros((TE, 1, mid.shape[2]), mid.dtype)
    midp = jnp.concatenate([zcol, mid, zcol], axis=1)      # (TE, W+2, P)
    acc2 = _conv3x3_tap_fused(midp, w2_ref, TH)            # (TH, W, P) f32
    out2 = acc2 * s2_ref[...] + b2_ref[...]

    # ---- residual add + ReLU ----
    identity = slab[2:2 + TH, 1:W + 1, :].astype(jnp.float32)
    # NOTE: for P < 128 this store is lane-masked; packing (W, P) onto a single
    # lane-dense axis would need a minor-dim-merging relayout that is omitted
    # here for lowering robustness.
    o_ref[0] = jnp.maximum(out2 + identity, 0.0).astype(o_ref.dtype)


def basic_block_forward(x_nchw, w1, bn1, w2, bn2, eps=1.001e-05):
    """BasicBlock forward. x_nchw: (N, C, H, W). bn* = (gamma, beta, mean, var)."""
    N, C, H, W = x_nchw.shape
    P = w1.shape[0]
    assert P == C, "stride=1 / no downsample requires planes == inplanes"

    # Row-tile height: largest divisor of H that is <= 8 (keeps per-tile values
    # small while giving the MXU M = TH*W rows and the grid N * H/TH programs).
    TH = max(d for d in range(1, min(H, 8) + 1) if H % d == 0)
    n_rt = H // TH

    cdt = jnp.bfloat16
    # NCHW -> NHWC, cast to bf16 and zero-pad (2 halo rows so each row tile can
    # recompute the conv1 intermediate locally, 1 column for conv padding).
    x_nhwc = jnp.transpose(x_nchw, (0, 2, 3, 1))
    xp = jnp.pad(x_nhwc, ((0, 0), (2, 2), (1, 1), (0, 0))).astype(cdt)

    # Torch conv weight (O, I, 3, 3) -> tap-fused (3 [dy], 3*I [dx-major], O).
    def fuse_w(w):
        o, i = w.shape[0], w.shape[1]
        return jnp.transpose(w, (2, 3, 1, 0)).reshape(3, 3 * i, o).astype(cdt)

    w1f, w2f = fuse_w(w1), fuse_w(w2)

    # Fold eval-mode BatchNorm into per-channel scale / bias (kept in f32).
    def fold(bn):
        g, b, m, v = bn
        s = g / jnp.sqrt(v + eps)
        return (s.reshape(1, -1).astype(jnp.float32),
                (b - m * s).reshape(1, -1).astype(jnp.float32))

    s1, bb1 = fold(bn1)
    s2, bb2 = fold(bn2)

    # VMEM budget: double-buffered input/output blocks + resident weights, with
    # headroom for in-kernel temporaries; clamped to a safe cross-chip range.
    in_blk = (H + 4) * (W + 2) * C * 2
    out_blk = TH * W * P * 4
    wts = (3 * 3 * C * P + 3 * 3 * P * P) * 2 + 4 * P * 4
    vmem_limit = int(min(max(4 * (2 * in_blk + 2 * out_blk + wts), 16 << 20),
                         48 << 20))

    out_nhwc = pl.pallas_call(
        _basic_block_kernel,
        out_shape=jax.ShapeDtypeStruct((N, H, W, P), jnp.float32),
        grid_spec=pltpu.PrefetchScalarGridSpec(
            num_scalar_prefetch=0,
            grid=(N, n_rt),
            in_specs=[
                pl.BlockSpec((1, H + 4, W + 2, C), lambda n, r: (n, 0, 0, 0)),
                pl.BlockSpec((3, 3 * C, P), lambda n, r: (0, 0, 0)),
                pl.BlockSpec((1, P), lambda n, r: (0, 0)),
                pl.BlockSpec((1, P), lambda n, r: (0, 0)),
                pl.BlockSpec((3, 3 * P, P), lambda n, r: (0, 0, 0)),
                pl.BlockSpec((1, P), lambda n, r: (0, 0)),
                pl.BlockSpec((1, P), lambda n, r: (0, 0)),
            ],
            out_specs=pl.BlockSpec((1, TH, W, P), lambda n, r: (n, r, 0, 0)),
        ),
        compiler_params=pltpu.CompilerParams(
            dimension_semantics=("parallel", "parallel"),
            vmem_limit_bytes=vmem_limit),
    )(xp, w1f, s1, bb1, w2f, s2, bb2)

    # NHWC -> NCHW to match the PyTorch module's output layout.
    return jnp.transpose(out_nhwc, (0, 3, 1, 2))


def _reference_forward(x, w1, bn1, w2, bn2, eps=1.001e-05):
    """Pure-JAX f32 reference in NCHW (mirrors the PyTorch module)."""
    def conv(x, w):
        return jax.lax.conv_general_dilated(
            x, w, window_strides=(1, 1), padding=((1, 1), (1, 1)),
            dimension_numbers=('NCHW', 'OIHW', 'NCHW'))

    def bn(x, p):
        g, b, m, v = (a[None, :, None, None] for a in p)
        return (x - m) / jnp.sqrt(v + eps) * g + b

    out = jax.nn.relu(bn(conv(x, w1), bn1))
    out = bn(conv(out, w2), bn2)
    return jax.nn.relu(out + x)


if __name__ == "__main__":
    key = jax.random.PRNGKey(0)
    N, C, H, W = 2, 8, 16, 16   # inplanes = planes = 8, stride = 1
    P = C

    keys = jax.random.split(key, 11)
    x = jax.random.normal(keys[0], (N, C, H, W), jnp.float32)
    w1 = jax.random.normal(keys[1], (P, C, 3, 3), jnp.float32) * 0.1
    w2 = jax.random.normal(keys[2], (P, P, 3, 3), jnp.float32) * 0.1
    bn1 = (jax.random.normal(keys[3], (P,)) * 0.1 + 1.0,
           jax.random.normal(keys[4], (P,)) * 0.1,
           jax.random.normal(keys[5], (P,)) * 0.1,
           jax.nn.softplus(jax.random.normal(keys[6], (P,))) + 0.5)
    bn2 = (jax.random.normal(keys[7], (P,)) * 0.1 + 1.0,
           jax.random.normal(keys[8], (P,)) * 0.1,
           jax.random.normal(keys[9], (P,)) * 0.1,
           jax.nn.softplus(jax.random.normal(keys[10], (P,))) + 0.5)

    out = jax.block_until_ready(basic_block_forward(x, w1, bn1, w2, bn2))
    ref = jax.block_until_ready(_reference_forward(x, w1, bn1, w2, bn2))

    assert out.shape == (N, C, H, W)
    err = float(jnp.max(jnp.abs(out - ref)))
    # bf16 activations/weights with f32 accumulation -> loosened tolerance.
    assert err < 5e-2, f"mismatch vs reference: max abs err = {err}"
    print("KERNEL_OK")
</pallas_src>

<mosaic_0001>
module attributes {stable_mosaic.version = 11 : i64} {
  func.func @_basic_block_kernel(%arg0: i32, %arg1: i32, %arg2: memref<1x20x18x8xbf16, #tpu.memory_space<vmem>>, %arg3: memref<3x24x8xbf16, #tpu.memory_space<vmem>>, %arg4: memref<1x8xf32, #tpu.memory_space<vmem>>, %arg5: memref<1x8xf32, #tpu.memory_space<vmem>>, %arg6: memref<3x24x8xbf16, #tpu.memory_space<vmem>>, %arg7: memref<1x8xf32, #tpu.memory_space<vmem>>, %arg8: memref<1x8xf32, #tpu.memory_space<vmem>>, %arg9: memref<1x8x16x8xf32, #tpu.memory_space<vmem>>) attributes {dimension_semantics = [#tpu.dimension_semantics<parallel>, #tpu.dimension_semantics<parallel>], iteration_bounds = array<i64: 2, 2>, scalar_prefetch = 0 : i64, scratch_operands = 0 : i64, tpu.core_type = #tpu.core_type<tc>, window_params = [{transform_indices = @transform_0, window_bounds = array<i64: 1, 20, 18, 8>}, {pipeline_mode = #tpu.pipeline_mode<synchronous>, transform_indices = @transform_1, window_bounds = array<i64: 3, 24, 8>}, {pipeline_mode = #tpu.pipeline_mode<synchronous>, transform_indices = @transform_2, window_bounds = array<i64: 1, 8>}, {pipeline_mode = #tpu.pipeline_mode<synchronous>, transform_indices = @transform_3, window_bounds = array<i64: 1, 8>}, {pipeline_mode = #tpu.pipeline_mode<synchronous>, transform_indices = @transform_4, window_bounds = array<i64: 3, 24, 8>}, {pipeline_mode = #tpu.pipeline_mode<synchronous>, transform_indices = @transform_5, window_bounds = array<i64: 1, 8>}, {pipeline_mode = #tpu.pipeline_mode<synchronous>, transform_indices = @transform_6, window_bounds = array<i64: 1, 8>}, {transform_indices = @transform_7, window_bounds = array<i64: 1, 8, 16, 8>}]} {
    %c8_i32 = arith.constant 8 : i32
    %0 = arith.muli %arg1, %c8_i32 : i32
    %1 = tpu.assume_multiple %0, 8 : i32
    %c0 = arith.constant 0 : index
    %2 = arith.index_cast %1 : i32 to index
    %c0_0 = arith.constant 0 : index
    %c0_1 = arith.constant 0 : index
    %3 = vector.load %arg2[%c0, %2, %c0_0, %c0_1] : memref<1x20x18x8xbf16, #tpu.memory_space<vmem>>, vector<1x12x18x8xbf16>
    %4 = vector.shape_cast %3 : vector<1x12x18x8xbf16> to vector<12x18x8xbf16>
    %5 = vector.extract_strided_slice %4 {offsets = [0, 0, 0], sizes = [12, 16, 8], strides = [1, 1, 1]} : vector<12x18x8xbf16> to vector<12x16x8xbf16>
    %6 = vector.extract_strided_slice %4 {offsets = [0, 1, 0], sizes = [12, 16, 8], strides = [1, 1, 1]} : vector<12x18x8xbf16> to vector<12x16x8xbf16>
    %7 = vector.extract_strided_slice %4 {offsets = [0, 2, 0], sizes = [12, 16, 8], strides = [1, 1, 1]} : vector<12x18x8xbf16> to vector<12x16x8xbf16>
    %8 = tpu.concatenate %5, %6, %7 in 2 : vector<12x16x8xbf16>, vector<12x16x8xbf16>, vector<12x16x8xbf16> -> vector<12x16x24xbf16>
    %9 = vector.extract_strided_slice %8 {offsets = [0, 0, 0], sizes = [10, 16, 24], strides = [1, 1, 1]} : vector<12x16x24xbf16> to vector<10x16x24xbf16>
    %c0_2 = arith.constant 0 : index
    %c0_3 = arith.constant 0 : index
    %c0_4 = arith.constant 0 : index
    %10 = vector.load %arg3[%c0_2, %c0_3, %c0_4] : memref<3x24x8xbf16, #tpu.memory_space<vmem>>, vector<1x24x8xbf16>
    %11 = vector.shape_cast %10 : vector<1x24x8xbf16> to vector<24x8xbf16>
    "tpu.trace_start"() <{level = 10 : i32, message = "rwk,kp->rwp"}> : () -> ()
    %cst = arith.constant dense<0.000000e+00> : vector<10x16x8xf32>
    %12 = tpu.matmul %9, %11, %cst {dimension_numbers = #tpu.dot_dimension_numbers<[2], [0], [0, 1], [1], [0, 0, 0, 1, 1, 1], [], []>} : vector<10x16x24xbf16>, vector<24x8xbf16>, vector<10x16x8xf32> -> vector<10x16x8xf32>
    "tpu.trace_stop"() : () -> ()
    %13 = vector.extract_strided_slice %8 {offsets = [1, 0, 0], sizes = [10, 16, 24], strides = [1, 1, 1]} : vector<12x16x24xbf16> to vector<10x16x24xbf16>
    %c1 = arith.constant 1 : index
    %c0_5 = arith.constant 0 : index
    %c0_6 = arith.constant 0 : index
    %14 = vector.load %arg3[%c1, %c0_5, %c0_6] : memref<3x24x8xbf16, #tpu.memory_space<vmem>>, vector<1x24x8xbf16>
    %15 = vector.shape_cast %14 : vector<1x24x8xbf16> to vector<24x8xbf16>
    "tpu.trace_start"() <{level = 10 : i32, message = "rwk,kp->rwp"}> : () -> ()
    %cst_7 = arith.constant dense<0.000000e+00> : vector<10x16x8xf32>
    %16 = tpu.matmul %13, %15, %cst_7 {dimension_numbers = #tpu.dot_dimension_numbers<[2], [0], [0, 1], [1], [0, 0, 0, 1, 1, 1], [], []>} : vector<10x16x24xbf16>, vector<24x8xbf16>, vector<10x16x8xf32> -> vector<10x16x8xf32>
    "tpu.trace_stop"() : () -> ()
    %17 = arith.addf %12, %16 : vector<10x16x8xf32>
    %18 = vector.extract_strided_slice %8 {offsets = [2, 0, 0], sizes = [10, 16, 24], strides = [1, 1, 1]} : vector<12x16x24xbf16> to vector<10x16x24xbf16>
    %c2 = arith.constant 2 : index
    %c0_8 = arith.constant 0 : index
    %c0_9 = arith.constant 0 : index
    %19 = vector.load %arg3[%c2, %c0_8, %c0_9] : memref<3x24x8xbf16, #tpu.memory_space<vmem>>, vector<1x24x8xbf16>
    %20 = vector.shape_cast %19 : vector<1x24x8xbf16> to vector<24x8xbf16>
    "tpu.trace_start"() <{level = 10 : i32, message = "rwk,kp->rwp"}> : () -> ()
    %cst_10 = arith.constant dense<0.000000e+00> : vector<10x16x8xf32>
    %21 = tpu.matmul %18, %20, %cst_10 {dimension_numbers = #tpu.dot_dimension_numbers<[2], [0], [0, 1], [1], [0, 0, 0, 1, 1, 1], [], []>} : vector<10x16x24xbf16>, vector<24x8xbf16>, vector<10x16x8xf32> -> vector<10x16x8xf32>
    "tpu.trace_stop"() : () -> ()
    %22 = arith.addf %17, %21 : vector<10x16x8xf32>
    %c0_11 = arith.constant 0 : index
    %c0_12 = arith.constant 0 : index
    %23 = vector.load %arg4[%c0_11, %c0_12] : memref<1x8xf32, #tpu.memory_space<vmem>>, vector<1x8xf32>
    %24 = vector.shape_cast %23 : vector<1x8xf32> to vector<1x1x8xf32>
    %25 = vector.broadcast %24 : vector<1x1x8xf32> to vector<10x16x8xf32>
    %26 = arith.mulf %22, %25 : vector<10x16x8xf32>
    %c0_13 = arith.constant 0 : index
    %c0_14 = arith.constant 0 : index
    %27 = vector.load %arg5[%c0_13, %c0_14] : memref<1x8xf32, #tpu.memory_space<vmem>>, vector<1x8xf32>
    %28 = vector.shape_cast %27 : vector<1x8xf32> to vector<1x1x8xf32>
    %29 = vector.broadcast %28 : vector<1x1x8xf32> to vector<10x16x8xf32>
    %30 = arith.addf %26, %29 : vector<10x16x8xf32>
    %cst_15 = arith.constant 0.000000e+00 : f32
    %31 = vector.broadcast %cst_15 : f32 to vector<10x16x8xf32>
    %32 = arith.maximumf %30, %31 : vector<10x16x8xf32>
    %33 = tpu.iota {dimensions = array<i32: 0>} : vector<10x1x1xi32>
    %34 = vector.broadcast %1 : i32 to vector<10x1x1xi32>
    %35 = arith.addi %34, %33 : vector<10x1x1xi32>
    %c1_i32 = arith.constant 1 : i32
    %36 = vector.broadcast %c1_i32 : i32 to vector<10x1x1xi32>
    %37 = arith.subi %35, %36 : vector<10x1x1xi32>
    %c0_i32 = arith.constant 0 : i32
    %38 = vector.broadcast %c0_i32 : i32 to vector<10x1x1xi32>
    %39 = arith.cmpi sge, %37, %38 : vector<10x1x1xi32>
    %c16_i32 = arith.constant 16 : i32
    %40 = vector.broadcast %c16_i32 : i32 to vector<10x1x1xi32>
    %41 = arith.cmpi slt, %37, %40 : vector<10x1x1xi32>
    %42 = arith.andi %39, %41 : vector<10x1x1xi1>
    %cst_16 = arith.constant 0.000000e+00 : f32
    %43 = vector.shape_cast %42 : vector<10x1x1xi1> to vector<10x1x1xi1>
    %44 = vector.broadcast %43 : vector<10x1x1xi1> to vector<10x16x8xi1>
    %45 = vector.broadcast %cst_16 : f32 to vector<10x16x8xf32>
    %46 = arith.select %44, %32, %45 : vector<10x16x8xi1>, vector<10x16x8xf32>
    %47 = arith.truncf %46 : vector<10x16x8xf32> to vector<10x16x8xbf16>
    %cst_17 = arith.constant 0.000000e+00 : bf16
    %48 = vector.broadcast %cst_17 : bf16 to vector<10x1x8xbf16>
    %49 = tpu.concatenate %48, %47, %48 in 1 : vector<10x1x8xbf16>, vector<10x16x8xbf16>, vector<10x1x8xbf16> -> vector<10x18x8xbf16>
    %50 = vector.extract_strided_slice %49 {offsets = [0, 0, 0], sizes = [10, 16, 8], strides = [1, 1, 1]} : vector<10x18x8xbf16> to vector<10x16x8xbf16>
    %51 = vector.extract_strided_slice %49 {offsets = [0, 1, 0], sizes = [10, 16, 8], strides = [1, 1, 1]} : vector<10x18x8xbf16> to vector<10x16x8xbf16>
    %52 = vector.extract_strided_slice %49 {offsets = [0, 2, 0], sizes = [10, 16, 8], strides = [1, 1, 1]} : vector<10x18x8xbf16> to vector<10x16x8xbf16>
    %53 = tpu.concatenate %50, %51, %52 in 2 : vector<10x16x8xbf16>, vector<10x16x8xbf16>, vector<10x16x8xbf16> -> vector<10x16x24xbf16>
    %54 = vector.extract_strided_slice %53 {offsets = [0, 0, 0], sizes = [8, 16, 24], strides = [1, 1, 1]} : vector<10x16x24xbf16> to vector<8x16x24xbf16>
    %c0_18 = arith.constant 0 : index
    %c0_19 = arith.constant 0 : index
    %c0_20 = arith.constant 0 : index
    %55 = vector.load %arg6[%c0_18, %c0_19, %c0_20] : memref<3x24x8xbf16, #tpu.memory_space<vmem>>, vector<1x24x8xbf16>
    %56 = vector.shape_cast %55 : vector<1x24x8xbf16> to vector<24x8xbf16>
    "tpu.trace_start"() <{level = 10 : i32, message = "rwk,kp->rwp"}> : () -> ()
    %cst_21 = arith.constant dense<0.000000e+00> : vector<8x16x8xf32>
    %57 = tpu.matmul %54, %56, %cst_21 {dimension_numbers = #tpu.dot_dimension_numbers<[2], [0], [0, 1], [1], [0, 0, 0, 1, 1, 1], [], []>} : vector<8x16x24xbf16>, vector<24x8xbf16>, vector<8x16x8xf32> -> vector<8x16x8xf32>
    "tpu.trace_stop"() : () -> ()
    %58 = vector.extract_strided_slice %53 {offsets = [1, 0, 0], sizes = [8, 16, 24], strides = [1, 1, 1]} : vector<10x16x24xbf16> to vector<8x16x24xbf16>
    %c1_22 = arith.constant 1 : index
    %c0_23 = arith.constant 0 : index
    %c0_24 = arith.constant 0 : index
    %59 = vector.load %arg6[%c1_22, %c0_23, %c0_24] : memref<3x24x8xbf16, #tpu.memory_space<vmem>>, vector<1x24x8xbf16>
    %60 = vector.shape_cast %59 : vector<1x24x8xbf16> to vector<24x8xbf16>
    "tpu.trace_start"() <{level = 10 : i32, message = "rwk,kp->rwp"}> : () -> ()
    %cst_25 = arith.constant dense<0.000000e+00> : vector<8x16x8xf32>
    %61 = tpu.matmul %58, %60, %cst_25 {dimension_numbers = #tpu.dot_dimension_numbers<[2], [0], [0, 1], [1], [0, 0, 0, 1, 1, 1], [], []>} : vector<8x16x24xbf16>, vector<24x8xbf16>, vector<8x16x8xf32> -> vector<8x16x8xf32>
    "tpu.trace_stop"() : () -> ()
    %62 = arith.addf %57, %61 : vector<8x16x8xf32>
    %63 = vector.extract_strided_slice %53 {offsets = [2, 0, 0], sizes = [8, 16, 24], strides = [1, 1, 1]} : vector<10x16x24xbf16> to vector<8x16x24xbf16>
    %c2_26 = arith.constant 2 : index
    %c0_27 = arith.constant 0 : index
    %c0_28 = arith.constant 0 : index
    %64 = vector.load %arg6[%c2_26, %c0_27, %c0_28] : memref<3x24x8xbf16, #tpu.memory_space<vmem>>, vector<1x24x8xbf16>
    %65 = vector.shape_cast %64 : vector<1x24x8xbf16> to vector<24x8xbf16>
    "tpu.trace_start"() <{level = 10 : i32, message = "rwk,kp->rwp"}> : () -> ()
    %cst_29 = arith.constant dense<0.000000e+00> : vector<8x16x8xf32>
    %66 = tpu.matmul %63, %65, %cst_29 {dimension_numbers = #tpu.dot_dimension_numbers<[2], [0], [0, 1], [1], [0, 0, 0, 1, 1, 1], [], []>} : vector<8x16x24xbf16>, vector<24x8xbf16>, vector<8x16x8xf32> -> vector<8x16x8xf32>
    "tpu.trace_stop"() : () -> ()
    %67 = arith.addf %62, %66 : vector<8x16x8xf32>
    %c0_30 = arith.constant 0 : index
    %c0_31 = arith.constant 0 : index
    %68 = vector.load %arg7[%c0_30, %c0_31] : memref<1x8xf32, #tpu.memory_space<vmem>>, vector<1x8xf32>
    %69 = vector.shape_cast %68 : vector<1x8xf32> to vector<1x1x8xf32>
    %70 = vector.broadcast %69 : vector<1x1x8xf32> to vector<8x16x8xf32>
    %71 = arith.mulf %67, %70 : vector<8x16x8xf32>
    %c0_32 = arith.constant 0 : index
    %c0_33 = arith.constant 0 : index
    %72 = vector.load %arg8[%c0_32, %c0_33] : memref<1x8xf32, #tpu.memory_space<vmem>>, vector<1x8xf32>
    %73 = vector.shape_cast %72 : vector<1x8xf32> to vector<1x1x8xf32>
    %74 = vector.broadcast %73 : vector<1x1x8xf32> to vector<8x16x8xf32>
    %75 = arith.addf %71, %74 : vector<8x16x8xf32>
    %76 = vector.extract_strided_slice %4 {offsets = [2, 1, 0], sizes = [8, 16, 8], strides = [1, 1, 1]} : vector<12x18x8xbf16> to vector<8x16x8xbf16>
    %77 = arith.extf %76 : vector<8x16x8xbf16> to vector<8x16x8xf32>
    %78 = arith.addf %75, %77 : vector<8x16x8xf32>
    %cst_34 = arith.constant 0.000000e+00 : f32
    %79 = vector.broadcast %cst_34 : f32 to vector<8x16x8xf32>
    %80 = arith.maximumf %78, %79 : vector<8x16x8xf32>
    %c0_35 = arith.constant 0 : index
    %c0_36 = arith.constant 0 : index
    %c0_37 = arith.constant 0 : index
    %c0_38 = arith.constant 0 : index
    %81 = vector.load %arg9[%c0_35, %c0_36, %c0_37, %c0_38] : memref<1x8x16x8xf32, #tpu.memory_space<vmem>>, vector<1x8x16x8xf32>
    %82 = vector.shape_cast %81 : vector<1x8x16x8xf32> to vector<8x16x8xf32>
    %83 = vector.shape_cast %80 : vector<8x16x8xf32> to vector<1x8x16x8xf32>
    tpu.vector_store %arg9[%c0_35, %c0_36, %c0_37, %c0_38], %83 {strides = array<i32>} : memref<1x8x16x8xf32, #tpu.memory_space<vmem>>, vector<1x8x16x8xf32>,
    return
  }
  func.func @transform_0(%arg0: i32, %arg1: i32) -> (i32, i32, i32, i32) {
    %c0_i32 = arith.constant 0 : i32
    %c0_i32_0 = arith.constant 0 : i32
    %c0_i32_1 = arith.constant 0 : i32
    %c0_i32_2 = arith.constant 0 : i32
    return %arg0, %c0_i32, %c0_i32_0, %c0_i32_1 : i32, i32, i32, i32
  }
  func.func @transform_1(%arg0: i32, %arg1: i32) -> (i32, i32, i32) {
    %c0_i32 = arith.constant 0 : i32
    %c0_i32_0 = arith.constant 0 : i32
    %c0_i32_1 = arith.constant 0 : i32
    %c0_i32_2 = arith.constant 0 : i32
    return %c0_i32, %c0_i32_0, %c0_i32_1 : i32, i32, i32
  }
  func.func @transform_2(%arg0: i32, %arg1: i32) -> (i32, i32) {
    %c0_i32 = arith.constant 0 : i32
    %c0_i32_0 = arith.constant 0 : i32
    %c0_i32_1 = arith.constant 0 : i32
    return %c0_i32, %c0_i32_0 : i32, i32
  }
  func.func @transform_3(%arg0: i32, %arg1: i32) -> (i32, i32) {
    %c0_i32 = arith.constant 0 : i32
    %c0_i32_0 = arith.constant 0 : i32
    %c0_i32_1 = arith.constant 0 : i32
    return %c0_i32, %c0_i32_0 : i32, i32
  }
  func.func @transform_4(%arg0: i32, %arg1: i32) -> (i32, i32, i32) {
    %c0_i32 = arith.constant 0 : i32
    %c0_i32_0 = arith.constant 0 : i32
    %c0_i32_1 = arith.constant 0 : i32
    %c0_i32_2 = arith.constant 0 : i32
    return %c0_i32, %c0_i32_0, %c0_i32_1 : i32, i32, i32
  }
  func.func @transform_5(%arg0: i32, %arg1: i32) -> (i32, i32) {
    %c0_i32 = arith.constant 0 : i32
    %c0_i32_0 = arith.constant 0 : i32
    %c0_i32_1 = arith.constant 0 : i32
    return %c0_i32, %c0_i32_0 : i32, i32
  }
  func.func @transform_6(%arg0: i32, %arg1: i32) -> (i32, i32) {
    %c0_i32 = arith.constant 0 : i32
    %c0_i32_0 = arith.constant 0 : i32
    %c0_i32_1 = arith.constant 0 : i32
    return %c0_i32, %c0_i32_0 : i32, i32
  }
  func.func @transform_7(%arg0: i32, %arg1: i32) -> (i32, i32, i32, i32) {
    %c0_i32 = arith.constant 0 : i32
    %c0_i32_0 = arith.constant 0 : i32
    %c0_i32_1 = arith.constant 0 : i32
    return %arg0, %arg1, %c0_i32, %c0_i32_0 : i32, i32, i32, i32
  }
}

</mosaic_0001>

<llo_original>
// kernel: tpu_custom_call.1
$region0: #{tpu_custom_call.1}
  #allocation0 [shape = 'u32[]', space=smem, size = 0x4, offset = 0x4, fixed_abs, tag = 'smem constant byte address 0x4 - core index']
  #allocation1 [shape = 'u32[144,128]{1,0:T(1,128)}', space=vmem, size = 0x12000, scoped, tag = 'internal scratch']
  %s0 = inlined_call_operand.vmem [shape: bf16[2,20,18,8], index: 0, kind: input, shape index: {}]
  %s1 = inlined_call_operand.vmem [shape: bf16[3,24,8], index: 1, kind: input, shape index: {}]
  %s2 = inlined_call_operand.vmem [shape: f32[1,8], index: 2, kind: input, shape index: {}]
  %s3 = inlined_call_operand.vmem [shape: f32[1,8], index: 3, kind: input, shape index: {}]
  %s4 = inlined_call_operand.vmem [shape: bf16[3,24,8], index: 4, kind: input, shape index: {}]
  %s5 = inlined_call_operand.vmem [shape: f32[1,8], index: 5, kind: input, shape index: {}]
  %s6 = inlined_call_operand.vmem [shape: f32[1,8], index: 6, kind: input, shape index: {}]
  %s7 = inlined_call_operand.vmem [shape: f32[2,16,16,8], index: 7, kind: output, shape index: {}]
  %s8 = sld [smem:[#allocation0]]
  $region61: #{tpu_custom_call.1} parent=0
    _
  %s10 = ssub.s32 1, %s8
  %s11 = scalar_select 0, %s10, %s8
  loop: start=0, step=1, limit=6
  $region2: #{tpu_custom_call.1} parent=0 // loop_pre_header
    _
  $region3: #{tpu_custom_call.1} parent=0 // loop_header
    %s13 = sphi 0, %s17
    %p14 = scmp.ge.s32.totalorder %s13, 6
    %s20 = sphi 0, %s32
    %s21 = sphi 0, %s28
    %s22 = sphi 0, %s20
    %s23 = sphi 0, %s21
    %s24 = sphi 0, %s22
    %s25 = sphi 0, %s23
    %s35 = sphi 0, %s37
    %s38 = sphi 0, %s35
    %s39 = sphi 0, %s38
    %s55 = sphi 0, %s39
    %s59 = sphi 0, %s59
    %s61 = sphi 0, %s59
    %s62 = sphi 0, %s61
    %s76 = sphi 0, %s62
    %s80 = sphi 0, %s80
    %s82 = sphi 0, %s80
    %s83 = sphi 0, %s82
    %s97 = sphi 0, %s83
    %s101 = sphi 0, %s101
    %s103 = sphi 0, %s101
    %s104 = sphi 0, %s103
    %s118 = sphi 0, %s104
    %s122 = sphi 0, %s122
    %s124 = sphi 0, %s122
    %s125 = sphi 0, %s124
    %s139 = sphi 0, %s125
    %s143 = sphi 0, %s143
    %s145 = sphi 0, %s143
    %s146 = sphi 0, %s145
    %s160 = sphi 0, %s146
    %s164 = sphi 0, %s164
    %s166 = sphi 0, %s164
    %s167 = sphi 0, %s166
    %s181 = sphi 0, %s167
    %s189 = sphi 0, %s191
    %s192 = sphi 0, %s189
    %s193 = sphi 0, %s192
    %s209 = sphi 0, %s193
  $region4: #{tpu_custom_call.1} parent=0 // loop_header_branch
    %16 = sbr.rel (%p14) target = $region8
  $region5: #{tpu_custom_call.1} parent=0 // loop_body
    %s18 = ssub.s32 %s13, 1
    %s19 = ssub.s32 %s13, 2
    %s26 = sadd.s32 1, %s21
    %p27 = scmp.ge.s32.totalorder %s26, 2
    %s28 = scalar_select %p27, 0, %s26
    %s29 = sadd.s32 1, %s20
    %s30 = scalar_select %p27, %s29, %s20
    %p31 = scmp.ge.s32.totalorder %s30, 2
    %s32 = scalar_select %p31, 0, %s30
    %s33 = ssub.s32 %s20, %s32
    %p34 = scmp.eq.s32.totalorder %s33, 0
    %s36 = sadd.s32 %s35, 1
    %s37 = scalar_select %p34, %s35, %s36
    %p40 = pneg %p34
    %p41 = scmp.eq.s32.totalorder %s13, 3
    %p42 = por %p40, %p41
    %p43 = scmp.ne.s32.totalorder %s35, %s38
    %p44 = scmp.eq.s32.totalorder %s13, 0
    %p45 = por %p43, %p44
    %p46 = scmp.ne.s32.totalorder %s35, %s38
    %p47 = scmp.eq.s32.totalorder %s18, 3
    %p48 = por %p46, %p47
    %p49 = scmp.ne.s32.totalorder %s38, %s39
    %p50 = scmp.eq.s32.totalorder %s18, 0
    %p51 = por %p49, %p50
    %p52 = scmp.ne.s32.totalorder %s38, %s39
    %p53 = scmp.eq.s32.totalorder %s19, 3
    %p54 = por %p52, %p53
    %p56 = scmp.ne.s32.totalorder %s39, %s55
    %p57 = scmp.eq.s32.totalorder %s19, 0
    %p58 = por %p56, %p57
    %s60 = sadd.s32 %s59, 1
    %p63 = scmp.eq.s32.totalorder %s13, 3
    %p64 = scmp.ne.s32.totalorder %s59, %s61
    %p65 = scmp.eq.s32.totalorder %s13, 0
    %p66 = por %p64, %p65
    %p67 = scmp.ne.s32.totalorder %s59, %s61
    %p68 = scmp.eq.s32.totalorder %s18, 3
    %p69 = por %p67, %p68
    %p70 = scmp.ne.s32.totalorder %s61, %s62
    %p71 = scmp.eq.s32.totalorder %s18, 0
    %p72 = por %p70, %p71
    %p73 = scmp.ne.s32.totalorder %s61, %s62
    %p74 = scmp.eq.s32.totalorder %s19, 3
    %p75 = por %p73, %p74
    %p77 = scmp.ne.s32.totalorder %s62, %s76
    %p78 = scmp.eq.s32.totalorder %s19, 0
    %p79 = por %p77, %p78
    %s81 = sadd.s32 %s80, 1
    %p84 = scmp.eq.s32.totalorder %s13, 3
    %p85 = scmp.ne.s32.totalorder %s80, %s82
    %p86 = scmp.eq.s32.totalorder %s13, 0
    %p87 = por %p85, %p86
    %p88 = scmp.ne.s32.totalorder %s80, %s82
    %p89 = scmp.eq.s32.totalorder %s18, 3
    %p90 = por %p88, %p89
    %p91 = scmp.ne.s32.totalorder %s82, %s83
    %p92 = scmp.eq.s32.totalorder %s18, 0
    %p93 = por %p91, %p92
    %p94 = scmp.ne.s32.totalorder %s82, %s83
    %p95 = scmp.eq.s32.totalorder %s19, 3
    %p96 = por %p94, %p95
    %p98 = scmp.ne.s32.totalorder %s83, %s97
    %p99 = scmp.eq.s32.totalorder %s19, 0
    %p100 = por %p98, %p99
    %s102 = sadd.s32 %s101, 1
    %p105 = scmp.eq.s32.totalorder %s13, 3
    %p106 = scmp.ne.s32.totalorder %s101, %s103
    %p107 = scmp.eq.s32.totalorder %s13, 0
    %p108 = por %p106, %p107
    %p109 = scmp.ne.s32.totalorder %s101, %s103
    %p110 = scmp.eq.s32.totalorder %s18, 3
    %p111 = por %p109, %p110
    %p112 = scmp.ne.s32.totalorder %s103, %s104
    %p113 = scmp.eq.s32.totalorder %s18, 0
    %p114 = por %p112, %p113
    %p115 = scmp.ne.s32.totalorder %s103, %s104
    %p116 = scmp.eq.s32.totalorder %s19, 3
    %p117 = por %p115, %p116
    %p119 = scmp.ne.s32.totalorder %s104, %s118
    %p120 = scmp.eq.s32.totalorder %s19, 0
    %p121 = por %p119, %p120
    %s123 = sadd.s32 %s122, 1
    %p126 = scmp.eq.s32.totalorder %s13, 3
    %p127 = scmp.ne.s32.totalorder %s122, %s124
    %p128 = scmp.eq.s32.totalorder %s13, 0
    %p129 = por %p127, %p128
    %p130 = scmp.ne.s32.totalorder %s122, %s124
    %p131 = scmp.eq.s32.totalorder %s18, 3
    %p132 = por %p130, %p131
    %p133 = scmp.ne.s32.totalorder %s124, %s125
    %p134 = scmp.eq.s32.totalorder %s18, 0
    %p135 = por %p133, %p134
    %p136 = scmp.ne.s32.totalorder %s124, %s125
    %p137 = scmp.eq.s32.totalorder %s19, 3
    %p138 = por %p136, %p137
    %p140 = scmp.ne.s32.totalorder %s125, %s139
    %p141 = scmp.eq.s32.totalorder %s19, 0
    %p142 = por %p140, %p141
    %s144 = sadd.s32 %s143, 1
    %p147 = scmp.eq.s32.totalorder %s13, 3
    %p148 = scmp.ne.s32.totalorder %s143, %s145
    %p149 = scmp.eq.s32.totalorder %s13, 0
    %p150 = por %p148, %p149
    %p151 = scmp.ne.s32.totalorder %s143, %s145
    %p152 = scmp.eq.s32.totalorder %s18, 3
    %p153 = por %p151, %p152
    %p154 = scmp.ne.s32.totalorder %s145, %s146
    %p155 = scmp.eq.s32.totalorder %s18, 0
    %p156 = por %p154, %p155
    %p157 = scmp.ne.s32.totalorder %s145, %s146
    %p158 = scmp.eq.s32.totalorder %s19, 3
    %p159 = por %p157, %p158
    %p161 = scmp.ne.s32.totalorder %s146, %s160
    %p162 = scmp.eq.s32.totalorder %s19, 0
    %p163 = por %p161, %p162
    %s165 = sadd.s32 %s164, 1
    %p168 = scmp.eq.s32.totalorder %s13, 3
    %p169 = scmp.ne.s32.totalorder %s164, %s166
    %p170 = scmp.eq.s32.totalorder %s13, 0
    %p171 = por %p169, %p170
    %p172 = scmp.ne.s32.totalorder %s164, %s166
    %p173 = scmp.eq.s32.totalorder %s18, 3
    %p174 = por %p172, %p173
    %p175 = scmp.ne.s32.totalorder %s166, %s167
    %p176 = scmp.eq.s32.totalorder %s18, 0
    %p177 = por %p175, %p176
    %p178 = scmp.ne.s32.totalorder %s166, %s167
    %p179 = scmp.eq.s32.totalorder %s19, 3
    %p180 = por %p178, %p179
    %p182 = scmp.ne.s32.totalorder %s167, %s181
    %p183 = scmp.eq.s32.totalorder %s19, 0
    %p184 = por %p182, %p183
    %s185 = ssub.s32 %s20, %s32
    %s186 = ssub.s32 %s21, %s28
    %s187 = sor.u32 %s185, %s186
    %p188 = scmp.eq.s32.totalorder %s187, 0
    %s190 = sadd.s32 %s189, 1
    %s191 = scalar_select %p188, %s189, %s190
    %p194 = pneg %p188
    %p195 = scmp.eq.s32.totalorder %s13, 3
    %p196 = por %p194, %p195
    %p197 = scmp.ne.s32.totalorder %s189, %s192
    %p198 = scmp.eq.s32.totalorder %s13, 0
    %p199 = por %p197, %p198
    %p200 = scmp.ne.s32.totalorder %s189, %s192
    %p201 = scmp.eq.s32.totalorder %s18, 3
    %p202 = por %p200, %p201
    %p203 = scmp.ne.s32.totalorder %s192, %s193
    %p204 = scmp.eq.s32.totalorder %s18, 0
    %p205 = por %p203, %p204
    %p206 = scmp.ne.s32.totalorder %s192, %s193
    %p207 = scmp.eq.s32.totalorder %s19, 3
    %p208 = por %p206, %p207
    %p210 = scmp.ne.s32.totalorder %s193, %s209
    %p211 = scmp.eq.s32.totalorder %s19, 0
    %p212 = por %p210, %p211
    %p213 = scmp.le.s32.totalorder 1, %s13
    %p214 = scmp.lt.s32.totalorder %s13, 5
    %p215 = pnand %p213, %p214
    %p216 = pneg %p215
    // Predicated region
    $region9: #{tpu_custom_call.1} parent=5 // pred_check
      _
    $region10: #{tpu_custom_call.1} parent=5 // pred_check_branch
      %218 = sbr.rel (%p215) target = $region12
    $region11: #{tpu_custom_call.1} parent=5 // pred_region
      %s219 = ssub.s32 %s13, 1
      // Predicated region
      $region13: #{tpu_custom_call.1} parent=11 // pred_check
        %p220 = pneg %p72
      $region14: #{tpu_custom_call.1} parent=11 // pred_check_branch
        %222 = sbr.rel (%p220) target = $region16
      $region15: #{tpu_custom_call.1} parent=11 // pred_region
        _
      $region16: #{tpu_custom_call.1} parent=11 // pred_fallthru
        _
      // Predicated region
      $region17: #{tpu_custom_call.1} parent=11 // pred_check
        %p223 = pneg %p93
      $region18: #{tpu_custom_call.1} parent=11 // pred_check_branch
        %225 = sbr.rel (%p223) target = $region20
      $region19: #{tpu_custom_call.1} parent=11 // pred_region
        _
      $region20: #{tpu_custom_call.1} parent=11 // pred_fallthru
        _
      // Predicated region
      $region21: #{tpu_custom_call.1} parent=11 // pred_check
        %p226 = pneg %p114
      $region22: #{tpu_custom_call.1} parent=11 // pred_check_branch
        %228 = sbr.rel (%p226) target = $region24
      $region23: #{tpu_custom_call.1} parent=11 // pred_region
        _
      $region24: #{tpu_custom_call.1} parent=11 // pred_fallthru
        _
      // Predicated region
      $region25: #{tpu_custom_call.1} parent=11 // pred_check
        %p229 = pneg %p135
      $region26: #{tpu_custom_call.1} parent=11 // pred_check_branch
        %231 = sbr.rel (%p229) target = $region28
      $region27: #{tpu_custom_call.1} parent=11 // pred_region
        _
      $region28: #{tpu_custom_call.1} parent=11 // pred_fallthru
        _
      // Predicated region
      $region29: #{tpu_custom_call.1} parent=11 // pred_check
        %p232 = pneg %p156
      $region30: #{tpu_custom_call.1} parent=11 // pred_check_branch
        %234 = sbr.rel (%p232) target = $region32
      $region31: #{tpu_custom_call.1} parent=11 // pred_region
        _
      $region32: #{tpu_custom_call.1} parent=11 // pred_fallthru
        _
      // Predicated region
      $region33: #{tpu_custom_call.1} parent=11 // pred_check
        %p235 = pneg %p177
      $region34: #{tpu_custom_call.1} parent=11 // pred_check_branch
        %237 = sbr.rel (%p235) target = $region36
      $region35: #{tpu_custom_call.1} parent=11 // pred_region
        _
      $region36: #{tpu_custom_call.1} parent=11 // pred_fallthru
        _
    $region12: #{tpu_custom_call.1} parent=5 // pred_fallthru
      _
    %p238 = scmp.lt.s32.totalorder %s13, 4
    // Predicated region
    $region37: #{tpu_custom_call.1} parent=5 // pred_check
      %p239 = pneg %p238
    $region38: #{tpu_custom_call.1} parent=5 // pred_check_branch
      %241 = sbr.rel (%p239) target = $region40
    $region39: #{tpu_custom_call.1} parent=5 // pred_region
      // Predicated region
      $region41: #{tpu_custom_call.1} parent=39 // pred_check
        %p242 = pneg %p45
      $region42: #{tpu_custom_call.1} parent=39 // pred_check_branch
        %244 = sbr.rel (%p242) target = $region44
      $region43: #{tpu_custom_call.1} parent=39 // pred_region
        %p245 = scmp.lt.s32.totalorder %s20, 1
        %s246 = scalar_select %p245, %s20, 1
        %s247 = smul.addr %s246, 60
        %s248 = smul.addr %s247, 4
        %s249 = scalar_lea.vmem %s0, %s248
      $region44: #{tpu_custom_call.1} parent=39 // pred_fallthru
        _
    $region40: #{tpu_custom_call.1} parent=5 // pred_fallthru
      _
    %p250 = scmp.le.s32.totalorder 1, %s13
    %p251 = scmp.lt.s32.totalorder %s13, 5
    %p252 = pnand %p250, %p251
    %p253 = pneg %p252
    // Predicated region
    $region45: #{tpu_custom_call.1} parent=5 // pred_check
      _
    $region46: #{tpu_custom_call.1} parent=5 // pred_check_branch
      %255 = sbr.rel (%p252) target = $region48
    $region47: #{tpu_custom_call.1} parent=5 // pred_region
      %s256 = ssub.s32 %s13, 1
      %p257 = scmp.lt.s32.totalorder %s22, 1
      %s258 = scalar_select %p257, %s22, 1
      %s259 = smul.addr %s258, 60
      %s260 = smul.addr %s259, 4
      %s261 = scalar_lea.vmem %s0, %s260
      %p262 = pneg %p51
      %p263 = pneg %p48
      %p264 = pneg %p72
      %p265 = pneg %p69
      %p266 = pneg %p93
      %p267 = pneg %p90
      %p268 = pneg %p114
      %p269 = pneg %p111
      %p270 = pneg %p135
      %p271 = pneg %p132
      %p272 = pneg %p156
      %p273 = pneg %p153
      %p274 = pneg %p177
      %p275 = pneg %p174
      %p276 = pneg %p205
      %p277 = pneg %p202
      %s278 = smul.u32 8, %s23
      %p279 = scmp.lt.s32.totalorder %s22, 1
      %s280 = scalar_select %p279, %s22, 1
      %p281 = scmp.lt.s32.totalorder %s278, 15
      %s282 = scalar_select %p281, %s278, 15
      %s283 = smul.addr %s282, 2
      %s284 = smul.addr %s280, 32
      %s285 = sadd.s32 %s283, %s284
      %s286 = smul.addr %s285, 8
      %s287 = scalar_lea.vmem %s7, %s286
      %p288 = scmp.lt.s32.totalorder %s22, 1
      %s289 = scalar_select %p288, %s22, 1
      %s290 = smul.addr %s289, 60
      %s291 = smul.addr %s290, 4
      %s292 = scalar_lea.vmem %s0, %s291
      %s293 = smul.u32 8, %s23
      %p294 = scmp.lt.s32.totalorder %s22, 1
      %s295 = scalar_select %p294, %s22, 1
      %p296 = scmp.lt.s32.totalorder %s293, 15
      %s297 = scalar_select %p296, %s293, 15
      %s298 = smul.addr %s297, 2
      %s299 = smul.addr %s295, 32
      %s300 = sadd.s32 %s298, %s299
      %s301 = smul.addr %s300, 8
      %s302 = scalar_lea.vmem %s7, %s301
      %s303 = smul.u32 8, %s23
      %s305 = smul.u32 %s23, 8
      %s306 = smul.u32 %s305, 3
      %s307 = smul.addr %s306, 4
      %s308 = scalar_lea.vmem %s292, %s307
      %v309 = vld [vmem:[%s308] sm:$0xf]
      %v310 = vld [vmem:[%s308 + $0x4] sm:$0xf]
      %v311 = vld [vmem:[%s308 + $0x8] sm:$0x1]
      %v312 = vld [vmem:[%s308 + $0xc] sm:$0xf]
      %v313 = vld [vmem:[%s308 + $0x10] sm:$0xf]
      %v314 = vld [vmem:[%s308 + $0x14] sm:$0x1]
      %v315 = vld [vmem:[%s308 + $0x18] sm:$0xf]
      %v316 = vld [vmem:[%s308 + $0x1c] sm:$0xf]
      %v317 = vld [vmem:[%s308 + $0x20] sm:$0x1]
      %v318 = vld [vmem:[%s308 + $0x24] sm:$0xf]
      %v319 = vld [vmem:[%s308 + $0x28] sm:$0xf]
      %v320 = vld [vmem:[%s308 + $0x2c] sm:$0x1]
      %v321 = vld [vmem:[%s308 + $0x30] sm:$0xf]
      %v322 = vld [vmem:[%s308 + $0x34] sm:$0xf]
      %v323 = vld [vmem:[%s308 + $0x38] sm:$0x1]
      %v324 = vld [vmem:[%s308 + $0x3c] sm:$0xf]
      %v325 = vld [vmem:[%s308 + $0x40] sm:$0xf]
      %v326 = vld [vmem:[%s308 + $0x44] sm:$0x1]
      %v327 = vld [vmem:[%s308 + $0x48] sm:$0xf]
      %v328 = vld [vmem:[%s308 + $0x4c] sm:$0xf]
      %v329 = vld [vmem:[%s308 + $0x50] sm:$0x1]
      %v330 = vld [vmem:[%s308 + $0x54] sm:$0xf]
      %v331 = vld [vmem:[%s308 + $0x58] sm:$0xf]
      %v332 = vld [vmem:[%s308 + $0x5c] sm:$0x1]
      %v333 = vld [vmem:[%s308 + $0x60] sm:$0xf]
      %v334 = vld [vmem:[%s308 + $0x64] sm:$0xf]
      %v335 = vld [vmem:[%s308 + $0x68] sm:$0x1]
      %v336 = vld [vmem:[%s308 + $0x6c] sm:$0xf]
      %v337 = vld [vmem:[%s308 + $0x70] sm:$0xf]
      %v338 = vld [vmem:[%s308 + $0x74] sm:$0x1]
      %v339 = vld [vmem:[%s308 + $0x78] sm:$0xf]
      %v340 = vld [vmem:[%s308 + $0x7c] sm:$0xf]
      %v341 = vld [vmem:[%s308 + $0x80] sm:$0x1]
      %v342 = vld [vmem:[%s308 + $0x84] sm:$0xf]
      %v343 = vld [vmem:[%s308 + $0x88] sm:$0xf]
      %v344 = vld [vmem:[%s308 + $0x8c] sm:$0x1]
      %v369 = vunpack.c.l.b16 %v309
      %v370 = vunpack.c.l.b16 %v310
      %v371 = vunpack.c.l.b16 %v312
      %v372 = vunpack.c.l.b16 %v313
      %v373 = vunpack.c.l.b16 %v315
      %v374 = vunpack.c.l.b16 %v316
      %v375 = vunpack.c.l.b16 %v318
      %v376 = vunpack.c.l.b16 %v319
      %v377 = vunpack.c.l.b16 %v321
      %v378 = vunpack.c.l.b16 %v322
      %v379 = vunpack.c.l.b16 %v324
      %v380 = vunpack.c.l.b16 %v325
      %v381 = vunpack.c.l.b16 %v327
      %v382 = vunpack.c.l.b16 %v328
      %v383 = vunpack.c.l.b16 %v330
      %v384 = vunpack.c.l.b16 %v331
      %v385 = vunpack.c.l.b16 %v333
      %v386 = vunpack.c.l.b16 %v334
      %v387 = vunpack.c.l.b16 %v336
      %v388 = vunpack.c.l.b16 %v337
      %v389 = vunpack.c.l.b16 %v339
      %v390 = vunpack.c.l.b16 %v340
      %v391 = vunpack.c.l.b16 %v342
      %v392 = vunpack.c.l.b16 %v343
      %v393 = vpack.c.b16 %v370, %v369
      %v394 = vpack.c.b16 %v372, %v371
      %v395 = vpack.c.b16 %v374, %v373
      %v396 = vpack.c.b16 %v376, %v375
      %v397 = vpack.c.b16 %v378, %v377
      %v398 = vpack.c.b16 %v380, %v379
      %v399 = vpack.c.b16 %v382, %v381
      %v400 = vpack.c.b16 %v384, %v383
      %v401 = vpack.c.b16 %v386, %v385
      %v402 = vpack.c.b16 %v388, %v387
      %v403 = vpack.c.b16 %v390, %v389
      %v404 = vpack.c.b16 %v392, %v391
      %v417 = vunpack.c.l.b16 %v311
      %v418 = vunpack.c.l.b16 %v314
      %v419 = vunpack.c.l.b16 %v317
      %v420 = vunpack.c.l.b16 %v320
      %v421 = vunpack.c.l.b16 %v323
      %v422 = vunpack.c.l.b16 %v326
      %v423 = vunpack.c.l.b16 %v329
      %v424 = vunpack.c.l.b16 %v332
      %v425 = vunpack.c.l.b16 %v335
      %v426 = vunpack.c.l.b16 %v338
      %v427 = vunpack.c.l.b16 %v341
      %v428 = vunpack.c.l.b16 %v344
      %v429 = vpack.c.b16 %v417, %v417
      %v430 = vpack.c.b16 %v418, %v418
      %v431 = vpack.c.b16 %v419, %v419
      %v432 = vpack.c.b16 %v420, %v420
      %v433 = vpack.c.b16 %v421, %v421
      %v434 = vpack.c.b16 %v422, %v422
      %v435 = vpack.c.b16 %v423, %v423
      %v436 = vpack.c.b16 %v424, %v424
      %v437 = vpack.c.b16 %v425, %v425
      %v438 = vpack.c.b16 %v426, %v426
      %v439 = vpack.c.b16 %v427, %v427
      %v440 = vpack.c.b16 %v428, %v428
      %vm441 = vsmask.f32 7424
      %v443 = vshrl.u32 %v393, 16
      %v445 = vshll.u32 %v393, 16
      %v447 = vrot.slane %v445, 1
      %v448 = vor.u32 %v443, %v447
      %v450 = vshll.u32 %v429, 16
      %v452 = vrot.slane %v450, 1
      %v453 = vsel %vm441, %v448, %v452
      %v455 = vshrl.u32 %v394, 16
      %v457 = vshll.u32 %v394, 16
      %v459 = vrot.slane %v457, 1
      %v460 = vor.u32 %v455, %v459
      %v462 = vshll.u32 %v430, 16
      %v464 = vrot.slane %v462, 1
      %v465 = vsel %vm441, %v460, %v464
      %v467 = vshrl.u32 %v395, 16
      %v469 = vshll.u32 %v395, 16
      %v471 = vrot.slane %v469, 1
      %v472 = vor.u32 %v467, %v471
      %v474 = vshll.u32 %v431, 16
      %v476 = vrot.slane %v474, 1
      %v477 = vsel %vm441, %v472, %v476
      %v479 = vshrl.u32 %v396, 16
      %v481 = vshll.u32 %v396, 16
      %v483 = vrot.slane %v481, 1
      %v484 = vor.u32 %v479, %v483
      %v486 = vshll.u32 %v432, 16
      %v488 = vrot.slane %v486, 1
      %v489 = vsel %vm441, %v484, %v488
      %v491 = vshrl.u32 %v397, 16
      %v493 = vshll.u32 %v397, 16
      %v495 = vrot.slane %v493, 1
      %v496 = vor.u32 %v491, %v495
      %v498 = vshll.u32 %v433, 16
      %v500 = vrot.slane %v498, 1
      %v501 = vsel %vm441, %v496, %v500
      %v503 = vshrl.u32 %v398, 16
      %v505 = vshll.u32 %v398, 16
      %v507 = vrot.slane %v505, 1
      %v508 = vor.u32 %v503, %v507
      %v510 = vshll.u32 %v434, 16
      %v512 = vrot.slane %v510, 1
      %v513 = vsel %vm441, %v508, %v512
      %v515 = vshrl.u32 %v399, 16
      %v517 = vshll.u32 %v399, 16
      %v519 = vrot.slane %v517, 1
      %v520 = vor.u32 %v515, %v519
      %v522 = vshll.u32 %v435, 16
      %v524 = vrot.slane %v522, 1
      %v525 = vsel %vm441, %v520, %v524
      %v527 = vshrl.u32 %v400, 16
      %v529 = vshll.u32 %v400, 16
      %v531 = vrot.slane %v529, 1
      %v532 = vor.u32 %v527, %v531
      %v534 = vshll.u32 %v436, 16
      %v536 = vrot.slane %v534, 1
      %v537 = vsel %vm441, %v532, %v536
      %v539 = vshrl.u32 %v401, 16
      %v541 = vshll.u32 %v401, 16
      %v543 = vrot.slane %v541, 1
      %v544 = vor.u32 %v539, %v543
      %v546 = vshll.u32 %v437, 16
      %v548 = vrot.slane %v546, 1
      %v549 = vsel %vm441, %v544, %v548
      %v551 = vshrl.u32 %v402, 16
      %v553 = vshll.u32 %v402, 16
      %v555 = vrot.slane %v553, 1
      %v556 = vor.u32 %v551, %v555
      %v558 = vshll.u32 %v438, 16
      %v560 = vrot.slane %v558, 1
      %v561 = vsel %vm441, %v556, %v560
      %v563 = vshrl.u32 %v403, 16
      %v565 = vshll.u32 %v403, 16
      %v567 = vrot.slane %v565, 1
      %v568 = vor.u32 %v563, %v567
      %v570 = vshll.u32 %v439, 16
      %v572 = vrot.slane %v570, 1
      %v573 = vsel %vm441, %v568, %v572
      %v575 = vshrl.u32 %v404, 16
      %v577 = vshll.u32 %v404, 16
      %v579 = vrot.slane %v577, 1
      %v580 = vor.u32 %v575, %v579
      %v582 = vshll.u32 %v440, 16
      %v584 = vrot.slane %v582, 1
      %v585 = vsel %vm441, %v580, %v584
      %586 = vrot.lane.b32.xlu0 %v453, 8
      %v587 = vpop.permute.xlu0 %586
      %588 = vrot.lane.b32.xlu0 %v465, 8
      %v589 = vpop.permute.xlu0 %588
      %590 = vrot.lane.b32.xlu0 %v477, 8
      %v591 = vpop.permute.xlu0 %590
      %592 = vrot.lane.b32.xlu0 %v489, 8
      %v593 = vpop.permute.xlu0 %592
      %594 = vrot.lane.b32.xlu0 %v501, 8
      %v595 = vpop.permute.xlu0 %594
      %596 = vrot.lane.b32.xlu0 %v513, 8
      %v597 = vpop.permute.xlu0 %596
      %598 = vrot.lane.b32.xlu0 %v525, 8
      %v599 = vpop.permute.xlu0 %598
      %600 = vrot.lane.b32.xlu0 %v537, 8
      %v601 = vpop.permute.xlu0 %600
      %602 = vrot.lane.b32.xlu0 %v549, 8
      %v603 = vpop.permute.xlu0 %602
      %604 = vrot.lane.b32.xlu0 %v561, 8
      %v605 = vpop.permute.xlu0 %604
      %606 = vrot.lane.b32.xlu0 %v573, 8
      %v607 = vpop.permute.xlu0 %606
      %608 = vrot.lane.b32.xlu0 %v585, 8
      %v609 = vpop.permute.xlu0 %608
      %vm610 = vcmask 1046528
      %v611 = vrot.slane %v393, 1
      %v612 = vrot.slane %v429, 1
      %v613 = vsel %vm610, %v611, %v612
      %v614 = vrot.slane %v394, 1
      %v615 = vrot.slane %v430, 1
      %v616 = vsel %vm610, %v614, %v615
      %v617 = vrot.slane %v395, 1
      %v618 = vrot.slane %v431, 1
      %v619 = vsel %vm610, %v617, %v618
      %v620 = vrot.slane %v396, 1
      %v621 = vrot.slane %v432, 1
      %v622 = vsel %vm610, %v620, %v621
      %v623 = vrot.slane %v397, 1
      %v624 = vrot.slane %v433, 1
      %v625 = vsel %vm610, %v623, %v624
      %v626 = vrot.slane %v398, 1
      %v627 = vrot.slane %v434, 1
      %v628 = vsel %vm610, %v626, %v627
      %v629 = vrot.slane %v399, 1
      %v630 = vrot.slane %v435, 1
      %v631 = vsel %vm610, %v629, %v630
      %v632 = vrot.slane %v400, 1
      %v633 = vrot.slane %v436, 1
      %v634 = vsel %vm610, %v632, %v633
      %v635 = vrot.slane %v401, 1
      %v636 = vrot.slane %v437, 1
      %v637 = vsel %vm610, %v635, %v636
      %v638 = vrot.slane %v402, 1
      %v639 = vrot.slane %v438, 1
      %v640 = vsel %vm610, %v638, %v639
      %v641 = vrot.slane %v403, 1
      %v642 = vrot.slane %v439, 1
      %v643 = vsel %vm610, %v641, %v642
      %v644 = vrot.slane %v404, 1
      %v645 = vrot.slane %v440, 1
      %v646 = vsel %vm610, %v644, %v645
      %647 = vrot.lane.b32.xlu0 %v613, 16
      %v648 = vpop.permute.xlu0 %647
      %649 = vrot.lane.b32.xlu0 %v616, 16
      %v650 = vpop.permute.xlu0 %649
      %651 = vrot.lane.b32.xlu0 %v619, 16
      %v652 = vpop.permute.xlu0 %651
      %653 = vrot.lane.b32.xlu0 %v622, 16
      %v654 = vpop.permute.xlu0 %653
      %655 = vrot.lane.b32.xlu0 %v625, 16
      %v656 = vpop.permute.xlu0 %655
      %657 = vrot.lane.b32.xlu0 %v628, 16
      %v658 = vpop.permute.xlu0 %657
      %659 = vrot.lane.b32.xlu0 %v631, 16
      %v660 = vpop.permute.xlu0 %659
      %661 = vrot.lane.b32.xlu0 %v634, 16
      %v662 = vpop.permute.xlu0 %661
      %663 = vrot.lane.b32.xlu0 %v637, 16
      %v664 = vpop.permute.xlu0 %663
      %665 = vrot.lane.b32.xlu0 %v640, 16
      %v666 = vpop.permute.xlu0 %665
      %667 = vrot.lane.b32.xlu0 %v643, 16
      %v668 = vpop.permute.xlu0 %667
      %669 = vrot.lane.b32.xlu0 %v646, 16
      %v670 = vpop.permute.xlu0 %669
      %vm671 = vcmask 64512
      %v673 = vsel %vm671, %v393, %v587
      %v675 = vsel %vm671, %v394, %v589
      %v677 = vsel %vm671, %v395, %v591
      %v679 = vsel %vm671, %v396, %v593
      %v681 = vsel %vm671, %v397, %v595
      %v683 = vsel %vm671, %v398, %v597
      %v685 = vsel %vm671, %v399, %v599
      %v687 = vsel %vm671, %v400, %v601
      %v689 = vsel %vm671, %v401, %v603
      %v691 = vsel %vm671, %v402, %v605
      %v693 = vsel %vm671, %v403, %v607
      %v695 = vsel %vm671, %v404, %v609
      %vm696 = vcmask 130048
      %v698 = vsel %vm696, %v673, %v648
      %v700 = vsel %vm696, %v675, %v650
      %v702 = vsel %vm696, %v677, %v652
      %v704 = vsel %vm696, %v679, %v654
      %v706 = vsel %vm696, %v681, %v656
      %v708 = vsel %vm696, %v683, %v658
      %v710 = vsel %vm696, %v685, %v660
      %v712 = vsel %vm696, %v687, %v662
      %v714 = vsel %vm696, %v689, %v664
      %v716 = vsel %vm696, %v691, %v666
      %v718 = vsel %vm696, %v693, %v668
      %v720 = vsel %vm696, %v695, %v670
      %v721 = vld [vmem:[%s1] sm:$0xf]
      %v722 = vld [vmem:[%s1 + $0x4] sm:$0xf]
      %v723 = vld [vmem:[%s1 + $0x8] sm:$0xf]
      %s724 = scalar_lea.vmem %s1, 12
      %v725 = vld [vmem:[%s724] sm:$0xf]
      %v726 = vld [vmem:[%s724 + $0x4] sm:$0xf]
      %v727 = vld [vmem:[%s724 + $0x8] sm:$0xf]
      %v731 = vunpack.c.l.b16 %v725
      %v732 = vunpack.c.l.b16 %v726
      %v733 = vunpack.c.l.b16 %v727
      %v734 = vpack.c.b16 %v732, %v731
      %v735 = vpack.c.b16 %v733, %v733
      %vm737 = vcmask 195584
      %v738 = vsel %vm737, %v700, 0
      %v740 = vsel %vm737, %v702, 0
      %v742 = vsel %vm737, %v704, 0
      %v744 = vsel %vm737, %v706, 0
      %v746 = vsel %vm737, %v708, 0
      %v748 = vsel %vm737, %v710, 0
      %v750 = vsel %vm737, %v712, 0
      %v752 = vsel %vm737, %v714, 0
      %v754 = vsel %vm737, %v716, 0
      %v756 = vsel %vm737, %v718, 0
      %vm758 = vcmask 1043456
      %v760 = vsel %vm758, %v735, 0
      %762 = vmatprep.subr.bf16.mxu0 0
      %763 = vmatpush1.bf16.msra.mxu0 %v734
      %764 = vmatprep.subr.bf16.mxu0 0
      %765 = vmatpush1.bf16.msra.mxu0 %v760
      %766 = vmatprep.subr.bf16.mxu0 0
      %767 = vmatpush1.bf16.msra.mxu0 0
      %768 = vmatprep.subr.bf16.mxu0 0
      %769 = vmatpush1.bf16.msra.mxu0 0
      %770 = vmatprep.subr.bf16.mxu0 0
      %771 = vmatpush1.bf16.msra.mxu0 0
      %772 = vmatprep.subr.bf16.mxu0 0
      %773 = vmatpush1.bf16.msra.mxu0 0
      %774 = vmatprep.subr.bf16.mxu0 0
      %775 = vmatpush1.bf16.msra.mxu0 0
      %776 = vmatprep.subr.bf16.mxu0 0
      %777 = vmatpush1.bf16.msra.mxu0 0
      %778 = vmatprep.subr.bf16.mxu0 0
      %779 = vmatpush1.bf16.msra.mxu0 0
      %780 = vmatprep.subr.bf16.mxu0 0
      %781 = vmatpush1.bf16.msra.mxu0 0
      %782 = vmatprep.subr.bf16.mxu0 0
      %783 = vmatpush1.bf16.msra.mxu0 0
      %784 = vmatprep.subr.bf16.mxu0 0
      %785 = vmatpush1.bf16.msra.mxu0 0
      %786 = vmatprep.subr.bf16.mxu0 0
      %787 = vmatpush1.bf16.msra.mxu0 0
      %788 = vmatprep.subr.bf16.mxu0 0
      %789 = vmatpush1.bf16.msra.mxu0 0
      %790 = vmatprep.subr.bf16.mxu0 0
      %791 = vmatpush1.bf16.msra.mxu0 0
      %792 = vmatprep.subr.bf16.mxu0 0
      %793 = vmatpush1.bf16.msra.mxu0 0
      %794 = vmatprep.mubr.bf16.mxu0 0
      %795 = vmatmul.mubr.bf16.gmra.mrb[0].mxu0 %v738
      %v796 = vpop.f32.mrb[0].mxu0
      %v797 = vadd.f32 0.0, %v796
      %v798 = vpop.f32.mrb[0].mxu0
      %v799 = vpop.f32.mrb[0].mxu0
      %v800 = vadd.f32 0.0, %v799
      %v801 = vpop.f32.mrb[0].mxu0
      %802 = vmatprep.mubr.bf16.mxu0 0
      %803 = vmatmul.mubr.bf16.gmra.mrb[0].mxu0 %v740
      %v804 = vpop.f32.mrb[0].mxu0
      %v805 = vadd.f32 0.0, %v804
      %v806 = vpop.f32.mrb[0].mxu0
      %v807 = vpop.f32.mrb[0].mxu0
      %v808 = vadd.f32 0.0, %v807
      %v809 = vpop.f32.mrb[0].mxu0
      %810 = vmatprep.mubr.bf16.mxu0 0
      %811 = vmatmul.mubr.bf16.gmra.mrb[0].mxu0 %v742
      %v812 = vpop.f32.mrb[0].mxu0
      %v813 = vadd.f32 0.0, %v812
      %v814 = vpop.f32.mrb[0].mxu0
      %v815 = vpop.f32.mrb[0].mxu0
      %v816 = vadd.f32 0.0, %v815
      %v817 = vpop.f32.mrb[0].mxu0
      %818 = vmatprep.mubr.bf16.mxu0 0
      %819 = vmatmul.mubr.bf16.gmra.mrb[0].mxu0 %v744
      %v820 = vpop.f32.mrb[0].mxu0
      %v821 = vadd.f32 0.0, %v820
      %v822 = vpop.f32.mrb[0].mxu0
      %v823 = vpop.f32.mrb[0].mxu0
      %v824 = vadd.f32 0.0, %v823
      %v825 = vpop.f32.mrb[0].mxu0
      %826 = vmatprep.mubr.bf16.mxu0 0
      %827 = vmatmul.mubr.bf16.gmra.mrb[0].mxu0 %v746
      %v828 = vpop.f32.mrb[0].mxu0
      %v829 = vadd.f32 0.0, %v828
      %v830 = vpop.f32.mrb[0].mxu0
      %v831 = vpop.f32.mrb[0].mxu0
      %v832 = vadd.f32 0.0, %v831
      %v833 = vpop.f32.mrb[0].mxu0
      %834 = vmatprep.mubr.bf16.mxu0 0
      %835 = vmatmul.mubr.bf16.gmra.mrb[0].mxu0 %v748
      %v836 = vpop.f32.mrb[0].mxu0
      %v837 = vadd.f32 0.0, %v836
      %v838 = vpop.f32.mrb[0].mxu0
      %v839 = vpop.f32.mrb[0].mxu0
      %v840 = vadd.f32 0.0, %v839
      %v841 = vpop.f32.mrb[0].mxu0
      %842 = vmatprep.mubr.bf16.mxu0 0
      %843 = vmatmul.mubr.bf16.gmra.mrb[0].mxu0 %v750
      %v844 = vpop.f32.mrb[0].mxu0
      %v845 = vadd.f32 0.0, %v844
      %v846 = vpop.f32.mrb[0].mxu0
      %v847 = vpop.f32.mrb[0].mxu0
      %v848 = vadd.f32 0.0, %v847
      %v849 = vpop.f32.mrb[0].mxu0
      %850 = vmatprep.mubr.bf16.mxu0 0
      %851 = vmatmul.mubr.bf16.gmra.mrb[0].mxu0 %v752
      %v852 = vpop.f32.mrb[0].mxu0
      %v853 = vadd.f32 0.0, %v852
      %v854 = vpop.f32.mrb[0].mxu0
      %v855 = vpop.f32.mrb[0].mxu0
      %v856 = vadd.f32 0.0, %v855
      %v857 = vpop.f32.mrb[0].mxu0
      %858 = vmatprep.mubr.bf16.mxu0 0
      %859 = vmatmul.mubr.bf16.gmra.mrb[0].mxu0 %v754
      %v860 = vpop.f32.mrb[0].mxu0
      %v861 = vadd.f32 0.0, %v860
      %v862 = vpop.f32.mrb[0].mxu0
      %v863 = vpop.f32.mrb[0].mxu0
      %v864 = vadd.f32 0.0, %v863
      %v865 = vpop.f32.mrb[0].mxu0
      %866 = vmatprep.mubr.bf16.mxu0 0
      %867 = vmatmul.mubr.bf16.gmra.mrb[0].mxu0 %v756
      %v868 = vpop.f32.mrb[0].mxu0
      %v869 = vadd.f32 0.0, %v868
      %v870 = vpop.f32.mrb[0].mxu0
      %v871 = vpop.f32.mrb[0].mxu0
      %v872 = vadd.f32 0.0, %v871
      %v873 = vpop.f32.mrb[0].mxu0
      %874 = vdwg.mxu0
      %v878 = vunpack.c.l.b16 %v721
      %v879 = vunpack.c.l.b16 %v722
      %v880 = vunpack.c.l.b16 %v723
      %v881 = vpack.c.b16 %v879, %v878
      %v882 = vpack.c.b16 %v880, %v880
      %v884 = vsel %vm737, %v698, 0
      %v887 = vsel %vm758, %v882, 0
      %889 = vmatprep.subr.bf16.mxu0 0
      %890 = vmatpush1.bf16.msra.mxu0 %v881
      %891 = vmatprep.subr.bf16.mxu0 0
      %892 = vmatpush1.bf16.msra.mxu0 %v887
      %893 = vmatprep.subr.bf16.mxu0 0
      %894 = vmatpush1.bf16.msra.mxu0 0
      %895 = vmatprep.subr.bf16.mxu0 0
      %896 = vmatpush1.bf16.msra.mxu0 0
      %897 = vmatprep.subr.bf16.mxu0 0
      %898 = vmatpush1.bf16.msra.mxu0 0
      %899 = vmatprep.subr.bf16.mxu0 0
      %900 = vmatpush1.bf16.msra.mxu0 0
      %901 = vmatprep.subr.bf16.mxu0 0
      %902 = vmatpush1.bf16.msra.mxu0 0
      %903 = vmatprep.subr.bf16.mxu0 0
      %904 = vmatpush1.bf16.msra.mxu0 0
      %905 = vmatprep.subr.bf16.mxu0 0
      %906 = vmatpush1.bf16.msra.mxu0 0
      %907 = vmatprep.subr.bf16.mxu0 0
      %908 = vmatpush1.bf16.msra.mxu0 0
      %909 = vmatprep.subr.bf16.mxu0 0
      %910 = vmatpush1.bf16.msra.mxu0 0
      %911 = vmatprep.subr.bf16.mxu0 0
      %912 = vmatpush1.bf16.msra.mxu0 0
      %913 = vmatprep.subr.bf16.mxu0 0
      %914 = vmatpush1.bf16.msra.mxu0 0
      %915 = vmatprep.subr.bf16.mxu0 0
      %916 = vmatpush1.bf16.msra.mxu0 0
      %917 = vmatprep.subr.bf16.mxu0 0
      %918 = vmatpush1.bf16.msra.mxu0 0
      %919 = vmatprep.subr.bf16.mxu0 0
      %920 = vmatpush1.bf16.msra.mxu0 0
      %921 = vmatprep.mubr.bf16.mxu0 0
      %922 = vmatmul.mubr.bf16.gmra.mrb[0].mxu0 %v884
      %v923 = vpop.f32.mrb[0].mxu0
      %v924 = vadd.f32 %v797, %v923
      %v925 = vpop.f32.mrb[0].mxu0
      %v926 = vpop.f32.mrb[0].mxu0
      %v927 = vadd.f32 %v800, %v926
      %v928 = vpop.f32.mrb[0].mxu0
      %929 = vmatprep.mubr.bf16.mxu0 0
      %930 = vmatmul.mubr.bf16.gmra.mrb[0].mxu0 %v738
      %v931 = vpop.f32.mrb[0].mxu0
      %v932 = vadd.f32 %v805, %v931
      %v933 = vpop.f32.mrb[0].mxu0
      %v934 = vpop.f32.mrb[0].mxu0
      %v935 = vadd.f32 %v808, %v934
      %v936 = vpop.f32.mrb[0].mxu0
      %937 = vmatprep.mubr.bf16.mxu0 0
      %938 = vmatmul.mubr.bf16.gmra.mrb[0].mxu0 %v740
      %v939 = vpop.f32.mrb[0].mxu0
      %v940 = vadd.f32 %v813, %v939
      %v941 = vpop.f32.mrb[0].mxu0
      %v942 = vpop.f32.mrb[0].mxu0
      %v943 = vadd.f32 %v816, %v942
      %v944 = vpop.f32.mrb[0].mxu0
      %945 = vmatprep.mubr.bf16.mxu0 0
      %946 = vmatmul.mubr.bf16.gmra.mrb[0].mxu0 %v742
      %v947 = vpop.f32.mrb[0].mxu0
      %v948 = vadd.f32 %v821, %v947
      %v949 = vpop.f32.mrb[0].mxu0
      %v950 = vpop.f32.mrb[0].mxu0
      %v951 = vadd.f32 %v824, %v950
      %v952 = vpop.f32.mrb[0].mxu0
      %953 = vmatprep.mubr.bf16.mxu0 0
      %954 = vmatmul.mubr.bf16.gmra.mrb[0].mxu0 %v744
      %v955 = vpop.f32.mrb[0].mxu0
      %v956 = vadd.f32 %v829, %v955
      %v957 = vpop.f32.mrb[0].mxu0
      %v958 = vpop.f32.mrb[0].mxu0
      %v959 = vadd.f32 %v832, %v958
      %v960 = vpop.f32.mrb[0].mxu0
      %961 = vmatprep.mubr.bf16.mxu0 0
      %962 = vmatmul.mubr.bf16.gmra.mrb[0].mxu0 %v746
      %v963 = vpop.f32.mrb[0].mxu0
      %v964 = vadd.f32 %v837, %v963
      %v965 = vpop.f32.mrb[0].mxu0
      %v966 = vpop.f32.mrb[0].mxu0
      %v967 = vadd.f32 %v840, %v966
      %v968 = vpop.f32.mrb[0].mxu0
      %969 = vmatprep.mubr.bf16.mxu0 0
      %970 = vmatmul.mubr.bf16.gmra.mrb[0].mxu0 %v748
      %v971 = vpop.f32.mrb[0].mxu0
      %v972 = vadd.f32 %v845, %v971
      %v973 = vpop.f32.mrb[0].mxu0
      %v974 = vpop.f32.mrb[0].mxu0
      %v975 = vadd.f32 %v848, %v974
      %v976 = vpop.f32.mrb[0].mxu0
      %977 = vmatprep.mubr.bf16.mxu0 0
      %978 = vmatmul.mubr.bf16.gmra.mrb[0].mxu0 %v750
      %v979 = vpop.f32.mrb[0].mxu0
      %v980 = vadd.f32 %v853, %v979
      %v981 = vpop.f32.mrb[0].mxu0
      %v982 = vpop.f32.mrb[0].mxu0
      %v983 = vadd.f32 %v856, %v982
      %v984 = vpop.f32.mrb[0].mxu0
      %985 = vmatprep.mubr.bf16.mxu0 0
      %986 = vmatmul.mubr.bf16.gmra.mrb[0].mxu0 %v752
      %v987 = vpop.f32.mrb[0].mxu0
      %v988 = vadd.f32 %v861, %v987
      %v989 = vpop.f32.mrb[0].mxu0
      %v990 = vpop.f32.mrb[0].mxu0
      %v991 = vadd.f32 %v864, %v990
      %v992 = vpop.f32.mrb[0].mxu0
      %993 = vmatprep.mubr.bf16.mxu0 0
      %994 = vmatmul.mubr.bf16.gmra.mrb[0].mxu0 %v754
      %v995 = vpop.f32.mrb[0].mxu0
      %v996 = vadd.f32 %v869, %v995
      %v997 = vpop.f32.mrb[0].mxu0
      %v998 = vpop.f32.mrb[0].mxu0
      %v999 = vadd.f32 %v872, %v998
      %v1000 = vpop.f32.mrb[0].mxu0
      %1001 = vdwg.mxu0
      %s1002 = scalar_lea.vmem %s1, 24
      %v1003 = vld [vmem:[%s1002] sm:$0xf]
      %v1004 = vld [vmem:[%s1002 + $0x4] sm:$0xf]
      %v1005 = vld [vmem:[%s1002 + $0x8] sm:$0xf]
      %v1009 = vunpack.c.l.b16 %v1003
      %v1010 = vunpack.c.l.b16 %v1004
      %v1011 = vunpack.c.l.b16 %v1005
      %v1012 = vpack.c.b16 %v1010, %v1009
      %v1013 = vpack.c.b16 %v1011, %v1011
      %v1015 = vsel %vm737, %v720, 0
      %v1018 = vsel %vm758, %v1013, 0
      %1020 = vmatprep.subr.bf16.mxu0 0
      %1021 = vmatpush1.bf16.msra.mxu0 %v1012
      %1022 = vmatprep.subr.bf16.mxu0 0
      %1023 = vmatpush1.bf16.msra.mxu0 %v1018
      %1024 = vmatprep.subr.bf16.mxu0 0
      %1025 = vmatpush1.bf16.msra.mxu0 0
      %1026 = vmatprep.subr.bf16.mxu0 0
      %1027 = vmatpush1.bf16.msra.mxu0 0
      %1028 = vmatprep.subr.bf16.mxu0 0
      %1029 = vmatpush1.bf16.msra.mxu0 0
      %1030 = vmatprep.subr.bf16.mxu0 0
      %1031 = vmatpush1.bf16.msra.mxu0 0
      %1032 = vmatprep.subr.bf16.mxu0 0
      %1033 = vmatpush1.bf16.msra.mxu0 0
      %1034 = vmatprep.subr.bf16.mxu0 0
      %1035 = vmatpush1.bf16.msra.mxu0 0
      %1036 = vmatprep.subr.bf16.mxu0 0
      %1037 = vmatpush1.bf16.msra.mxu0 0
      %1038 = vmatprep.subr.bf16.mxu0 0
      %1039 = vmatpush1.bf16.msra.mxu0 0
      %1040 = vmatprep.subr.bf16.mxu0 0
      %1041 = vmatpush1.bf16.msra.mxu0 0
      %1042 = vmatprep.subr.bf16.mxu0 0
      %1043 = vmatpush1.bf16.msra.mxu0 0
      %1044 = vmatprep.subr.bf16.mxu0 0
      %1045 = vmatpush1.bf16.msra.mxu0 0
      %1046 = vmatprep.subr.bf16.mxu0 0
      %1047 = vmatpush1.bf16.msra.mxu0 0
      %1048 = vmatprep.subr.bf16.mxu0 0
      %1049 = vmatpush1.bf16.msra.mxu0 0
      %1050 = vmatprep.subr.bf16.mxu0 0
      %1051 = vmatpush1.bf16.msra.mxu0 0
      %1052 = vmatprep.mubr.bf16.mxu0 0
      %1053 = vmatmul.mubr.bf16.gmra.mrb[0].mxu0 %v740
      %v1054 = vpop.f32.mrb[0].mxu0
      %v1055 = vadd.f32 0.0, %v1054
      %v1056 = vpop.f32.mrb[0].mxu0
      %v1057 = vpop.f32.mrb[0].mxu0
      %v1058 = vadd.f32 0.0, %v1057
      %v1059 = vpop.f32.mrb[0].mxu0
      %1060 = vmatprep.mubr.bf16.mxu0 0
      %1061 = vmatmul.mubr.bf16.gmra.mrb[0].mxu0 %v742
      %v1062 = vpop.f32.mrb[0].mxu0
      %v1063 = vadd.f32 0.0, %v1062
      %v1064 = vpop.f32.mrb[0].mxu0
      %v1065 = vpop.f32.mrb[0].mxu0
      %v1066 = vadd.f32 0.0, %v1065
      %v1067 = vpop.f32.mrb[0].mxu0
      %1068 = vmatprep.mubr.bf16.mxu0 0
      %1069 = vmatmul.mubr.bf16.gmra.mrb[0].mxu0 %v744
      %v1070 = vpop.f32.mrb[0].mxu0
      %v1071 = vadd.f32 0.0, %v1070
      %v1072 = vpop.f32.mrb[0].mxu0
      %v1073 = vpop.f32.mrb[0].mxu0
      %v1074 = vadd.f32 0.0, %v1073
      %v1075 = vpop.f32.mrb[0].mxu0
      %1076 = vmatprep.mubr.bf16.mxu0 0
      %1077 = vmatmul.mubr.bf16.gmra.mrb[0].mxu0 %v746
      %v1078 = vpop.f32.mrb[0].mxu0
      %v1079 = vadd.f32 0.0, %v1078
      %v1080 = vpop.f32.mrb[0].mxu0
      %v1081 = vpop.f32.mrb[0].mxu0
      %v1082 = vadd.f32 0.0, %v1081
      %v1083 = vpop.f32.mrb[0].mxu0
      %1084 = vmatprep.mubr.bf16.mxu0 0
      %1085 = vmatmul.mubr.bf16.gmra.mrb[0].mxu0 %v748
      %v1086 = vpop.f32.mrb[0].mxu0
      %v1087 = vadd.f32 0.0, %v1086
      %v1088 = vpop.f32.mrb[0].mxu0
      %v1089 = vpop.f32.mrb[0].mxu0
      %v1090 = vadd.f32 0.0, %v1089
      %v1091 = vpop.f32.mrb[0].mxu0
      %1092 = vmatprep.mubr.bf16.mxu0 0
      %1093 = vmatmul.mubr.bf16.gmra.mrb[0].mxu0 %v750
      %v1094 = vpop.f32.mrb[0].mxu0
      %v1095 = vadd.f32 0.0, %v1094
      %v1096 = vpop.f32.mrb[0].mxu0
      %v1097 = vpop.f32.mrb[0].mxu0
      %v1098 = vadd.f32 0.0, %v1097
      %v1099 = vpop.f32.mrb[0].mxu0
      %1100 = vmatprep.mubr.bf16.mxu0 0
      %1101 = vmatmul.mubr.bf16.gmra.mrb[0].mxu0 %v752
      %v1102 = vpop.f32.mrb[0].mxu0
      %v1103 = vadd.f32 0.0, %v1102
      %v1104 = vpop.f32.mrb[0].mxu0
      %v1105 = vpop.f32.mrb[0].mxu0
      %v1106 = vadd.f32 0.0, %v1105
      %v1107 = vpop.f32.mrb[0].mxu0
      %1108 = vmatprep.mubr.bf16.mxu0 0
      %1109 = vmatmul.mubr.bf16.gmra.mrb[0].mxu0 %v754
      %v1110 = vpop.f32.mrb[0].mxu0
      %v1111 = vadd.f32 0.0, %v1110
      %v1112 = vpop.f32.mrb[0].mxu0
      %v1113 = vpop.f32.mrb[0].mxu0
      %v1114 = vadd.f32 0.0, %v1113
      %v1115 = vpop.f32.mrb[0].mxu0
      %1116 = vmatprep.mubr.bf16.mxu0 0
      %1117 = vmatmul.mubr.bf16.gmra.mrb[0].mxu0 %v756
      %v1118 = vpop.f32.mrb[0].mxu0
      %v1119 = vadd.f32 0.0, %v1118
      %v1120 = vpop.f32.mrb[0].mxu0
      %v1121 = vpop.f32.mrb[0].mxu0
      %v1122 = vadd.f32 0.0, %v1121
      %v1123 = vpop.f32.mrb[0].mxu0
      %1124 = vmatprep.mubr.bf16.mxu0 0
      %1125 = vmatmul.mubr.bf16.gmra.mrb[0].mxu0 %v1015
      %v1126 = vpop.f32.mrb[0].mxu0
      %v1127 = vadd.f32 0.0, %v1126
      %v1128 = vpop.f32.mrb[0].mxu0
      %v1129 = vpop.f32.mrb[0].mxu0
      %v1130 = vadd.f32 0.0, %v1129
      %v1131 = vpop.f32.mrb[0].mxu0
      %1132 = vdwg.mxu0
      %v1133 = vadd.f32 %v924, %v1055
      %v1134 = vadd.f32 %v927, %v1058
      %v1135 = vadd.f32 %v932, %v1063
      %v1136 = vadd.f32 %v935, %v1066
      %v1137 = vadd.f32 %v940, %v1071
      %v1138 = vadd.f32 %v943, %v1074
      %v1139 = vadd.f32 %v948, %v1079
      %v1140 = vadd.f32 %v951, %v1082
      %v1141 = vadd.f32 %v956, %v1087
      %v1142 = vadd.f32 %v959, %v1090
      %v1143 = vadd.f32 %v964, %v1095
      %v1144 = vadd.f32 %v967, %v1098
      %v1145 = vadd.f32 %v972, %v1103
      %v1146 = vadd.f32 %v975, %v1106
      %v1147 = vadd.f32 %v980, %v1111
      %v1148 = vadd.f32 %v983, %v1114
      %v1149 = vadd.f32 %v988, %v1119
      %v1150 = vadd.f32 %v991, %v1122
      %v1151 = vadd.f32 %v996, %v1127
      %v1152 = vadd.f32 %v999, %v1130
      %v1153 = vld [vmem:[%s2] sm:$0x1]
      %v1155 = vlaneseq
      %v1156 = vshrl.u32 %v1155, 7
      %v1157 = vsub.s32 0, %v1156
      %v1158 = vrot.slane %v1153, %v1157
      %v1160 = vmul.f32 %v1133, %v1158
      %v1161 = vmul.f32 %v1134, %v1158
      %v1162 = vmul.f32 %v1135, %v1158
      %v1163 = vmul.f32 %v1136, %v1158
      %v1164 = vmul.f32 %v1137, %v1158
      %v1165 = vmul.f32 %v1138, %v1158
      %v1166 = vmul.f32 %v1139, %v1158
      %v1167 = vmul.f32 %v1140, %v1158
      %v1168 = vmul.f32 %v1141, %v1158
      %v1169 = vmul.f32 %v1142, %v1158
      %v1170 = vmul.f32 %v1143, %v1158
      %v1171 = vmul.f32 %v1144, %v1158
      %v1172 = vmul.f32 %v1145, %v1158
      %v1173 = vmul.f32 %v1146, %v1158
      %v1174 = vmul.f32 %v1147, %v1158
      %v1175 = vmul.f32 %v1148, %v1158
      %v1176 = vmul.f32 %v1149, %v1158
      %v1177 = vmul.f32 %v1150, %v1158
      %v1178 = vmul.f32 %v1151, %v1158
      %v1179 = vmul.f32 %v1152, %v1158
      %v1180 = vld [vmem:[%s3] sm:$0x1]
      %v1182 = vlaneseq
      %v1183 = vshrl.u32 %v1182, 7
      %v1184 = vsub.s32 0, %v1183
      %v1185 = vrot.slane %v1180, %v1184
      %v1187 = vadd.f32 %v1160, %v1185
      %v1188 = vadd.f32 %v1161, %v1185
      %v1189 = vadd.f32 %v1162, %v1185
      %v1190 = vadd.f32 %v1163, %v1185
      %v1191 = vadd.f32 %v1164, %v1185
      %v1192 = vadd.f32 %v1165, %v1185
      %v1193 = vadd.f32 %v1166, %v1185
      %v1194 = vadd.f32 %v1167, %v1185
      %v1195 = vadd.f32 %v1168, %v1185
      %v1196 = vadd.f32 %v1169, %v1185
      %v1197 = vadd.f32 %v1170, %v1185
      %v1198 = vadd.f32 %v1171, %v1185
      %v1199 = vadd.f32 %v1172, %v1185
      %v1200 = vadd.f32 %v1173, %v1185
      %v1201 = vadd.f32 %v1174, %v1185
      %v1202 = vadd.f32 %v1175, %v1185
      %v1203 = vadd.f32 %v1176, %v1185
      %v1204 = vadd.f32 %v1177, %v1185
      %v1205 = vadd.f32 %v1178, %v1185
      %v1206 = vadd.f32 %v1179, %v1185
      %v1207 = vmax.f32 %v1187, 0.0
      %v1208 = vmax.f32 %v1188, 0.0
      %v1209 = vmax.f32 %v1189, 0.0
      %v1210 = vmax.f32 %v1190, 0.0
      %v1211 = vmax.f32 %v1191, 0.0
      %v1212 = vmax.f32 %v1192, 0.0
      %v1213 = vmax.f32 %v1193, 0.0
      %v1214 = vmax.f32 %v1194, 0.0
      %v1215 = vmax.f32 %v1195, 0.0
      %v1216 = vmax.f32 %v1196, 0.0
      %v1217 = vmax.f32 %v1197, 0.0
      %v1218 = vmax.f32 %v1198, 0.0
      %v1219 = vmax.f32 %v1199, 0.0
      %v1220 = vmax.f32 %v1200, 0.0
      %v1221 = vmax.f32 %v1201, 0.0
      %v1222 = vmax.f32 %v1202, 0.0
      %v1223 = vmax.f32 %v1203, 0.0
      %v1224 = vmax.f32 %v1204, 0.0
      %v1225 = vmax.f32 %v1205, 0.0
      %v1226 = vmax.f32 %v1206, 0.0
      %v1227 = vstv %s305
      %v1228 = vadd.s32 %v1227, 2
      %v1229 = vadd.s32 %v1227, 3
      %v1230 = vadd.s32 %v1227, 4
      %v1231 = vadd.s32 %v1227, 5
      %v1232 = vadd.s32 %v1227, 6
      %v1233 = vadd.s32 %v1227, 7
      %v1234 = vadd.s32 %v1227, 8
      %v1235 = vadd.s32 %v1227, 9
      %v1236 = vsub.s32 %v1227, 1
      %v1237 = vsub.s32 %v1228, 1
      %v1238 = vsub.s32 %v1229, 1
      %v1239 = vsub.s32 %v1230, 1
      %v1240 = vsub.s32 %v1231, 1
      %v1241 = vsub.s32 %v1232, 1
      %v1242 = vsub.s32 %v1233, 1
      %v1243 = vsub.s32 %v1234, 1
      %v1244 = vsub.s32 %v1235, 1
      %vm1245 = vcmp.ge.s32.totalorder %v1236, 0
      %vm1246 = vcmp.ge.s32.totalorder %v1227, 0
      %vm1247 = vcmp.ge.s32.totalorder %v1237, 0
      %vm1248 = vcmp.ge.s32.totalorder %v1238, 0
      %vm1249 = vcmp.ge.s32.totalorder %v1239, 0
      %vm1250 = vcmp.ge.s32.totalorder %v1240, 0
      %vm1251 = vcmp.ge.s32.totalorder %v1241, 0
      %vm1252 = vcmp.ge.s32.totalorder %v1242, 0
      %vm1253 = vcmp.ge.s32.totalorder %v1243, 0
      %vm1254 = vcmp.ge.s32.totalorder %v1244, 0
      %vm1255 = vcmp.lt.s32.totalorder %v1236, 16
      %vm1256 = vcmp.lt.s32.totalorder %v1227, 16
      %vm1257 = vcmp.lt.s32.totalorder %v1237, 16
      %vm1258 = vcmp.lt.s32.totalorder %v1238, 16
      %vm1259 = vcmp.lt.s32.totalorder %v1239, 16
      %vm1260 = vcmp.lt.s32.totalorder %v1240, 16
      %vm1261 = vcmp.lt.s32.totalorder %v1241, 16
      %vm1262 = vcmp.lt.s32.totalorder %v1242, 16
      %vm1263 = vcmp.lt.s32.totalorder %v1243, 16
      %vm1264 = vcmp.lt.s32.totalorder %v1244, 16
      %vm1265 = vmand %vm1245, %vm1255
      %vm1266 = vmand %vm1246, %vm1256
      %vm1267 = vmand %vm1247, %vm1257
      %vm1268 = vmand %vm1248, %vm1258
      %vm1269 = vmand %vm1249, %vm1259
      %vm1270 = vmand %vm1250, %vm1260
      %vm1271 = vmand %vm1251, %vm1261
      %vm1272 = vmand %vm1252, %vm1262
      %vm1273 = vmand %vm1253, %vm1263
      %vm1274 = vmand %vm1254, %vm1264
      %v1275 = vsel %vm1265, 1, 0
      %v1276 = vsel %vm1266, 1, 0
      %v1277 = vsel %vm1267, 1, 0
      %v1278 = vsel %vm1268, 1, 0
      %v1279 = vsel %vm1269, 1, 0
      %v1280 = vsel %vm1270, 1, 0
      %v1281 = vsel %vm1271, 1, 0
      %v1282 = vsel %vm1272, 1, 0
      %v1283 = vsel %vm1273, 1, 0
      %v1284 = vsel %vm1274, 1, 0
      %vm1285 = vcmp.eq.s32.totalorder %v1275, 1
      %vm1286 = vcmp.eq.s32.totalorder %v1276, 1
      %vm1287 = vcmp.eq.s32.totalorder %v1277, 1
      %vm1288 = vcmp.eq.s32.totalorder %v1278, 1
      %vm1289 = vcmp.eq.s32.totalorder %v1279, 1
      %vm1290 = vcmp.eq.s32.totalorder %v1280, 1
      %vm1291 = vcmp.eq.s32.totalorder %v1281, 1
      %vm1292 = vcmp.eq.s32.totalorder %v1282, 1
      %vm1293 = vcmp.eq.s32.totalorder %v1283, 1
      %vm1294 = vcmp.eq.s32.totalorder %v1284, 1
      %v1295 = vsel %vm1285, %v1207, 0.0
      %v1296 = vsel %vm1285, %v1208, 0.0
      %v1297 = vsel %vm1286, %v1209, 0.0
      %v1298 = vsel %vm1286, %v1210, 0.0
      %v1299 = vsel %vm1287, %v1211, 0.0
      %v1300 = vsel %vm1287, %v1212, 0.0
      %v1301 = vsel %vm1288, %v1213, 0.0
      %v1302 = vsel %vm1288, %v1214, 0.0
      %v1303 = vsel %vm1289, %v1215, 0.0
      %v1304 = vsel %vm1289, %v1216, 0.0
      %v1305 = vsel %vm1290, %v1217, 0.0
      %v1306 = vsel %vm1290, %v1218, 0.0
      %v1307 = vsel %vm1291, %v1219, 0.0
      %v1308 = vsel %vm1291, %v1220, 0.0
      %v1309 = vsel %vm1292, %v1221, 0.0
      %v1310 = vsel %vm1292, %v1222, 0.0
      %v1311 = vsel %vm1293, %v1223, 0.0
      %v1312 = vsel %vm1293, %v1224, 0.0
      %v1313 = vsel %vm1294, %v1225, 0.0
      %v1314 = vsel %vm1294, %v1226, 0.0
      %v1315 = vpack.c.bf16 %v1296, %v1295
      %v1316 = vpack.c.bf16 %v1298, %v1297
      %v1317 = vpack.c.bf16 %v1300, %v1299
      %v1318 = vpack.c.bf16 %v1302, %v1301
      %v1319 = vpack.c.bf16 %v1304, %v1303
      %v1320 = vpack.c.bf16 %v1306, %v1305
      %v1321 = vpack.c.bf16 %v1308, %v1307
      %v1322 = vpack.c.bf16 %v1310, %v1309
      %v1323 = vpack.c.bf16 %v1312, %v1311
      %v1324 = vpack.c.bf16 %v1314, %v1313
      %v1326 = vshrl.u32 %v1315, 16
      %v1328 = vrot.slane %v1326, 7
      %v1329 = vshll.u32 %v1315, 16
      %v1331 = vor.u32 %v1328, %v1329
      %v1333 = vshrl.u32 %v1316, 16
      %v1335 = vrot.slane %v1333, 7
      %v1336 = vshll.u32 %v1316, 16
      %v1338 = vor.u32 %v1335, %v1336
      %v1340 = vshrl.u32 %v1317, 16
      %v1342 = vrot.slane %v1340, 7
      %v1343 = vshll.u32 %v1317, 16
      %v1345 = vor.u32 %v1342, %v1343
      %v1347 = vshrl.u32 %v1318, 16
      %v1349 = vrot.slane %v1347, 7
      %v1350 = vshll.u32 %v1318, 16
      %v1352 = vor.u32 %v1349, %v1350
      %v1354 = vshrl.u32 %v1319, 16
      %v1356 = vrot.slane %v1354, 7
      %v1357 = vshll.u32 %v1319, 16
      %v1359 = vor.u32 %v1356, %v1357
      %v1361 = vshrl.u32 %v1320, 16
      %v1363 = vrot.slane %v1361, 7
      %v1364 = vshll.u32 %v1320, 16
      %v1366 = vor.u32 %v1363, %v1364
      %v1368 = vshrl.u32 %v1321, 16
      %v1370 = vrot.slane %v1368, 7
      %v1371 = vshll.u32 %v1321, 16
      %v1373 = vor.u32 %v1370, %v1371
      %v1375 = vshrl.u32 %v1322, 16
      %v1377 = vrot.slane %v1375, 7
      %v1378 = vshll.u32 %v1322, 16
      %v1380 = vor.u32 %v1377, %v1378
      %v1382 = vshrl.u32 %v1323, 16
      %v1384 = vrot.slane %v1382, 7
      %v1385 = vshll.u32 %v1323, 16
      %v1387 = vor.u32 %v1384, %v1385
      %v1389 = vshrl.u32 %v1324, 16
      %v1391 = vrot.slane %v1389, 7
      %v1392 = vshll.u32 %v1324, 16
      %v1394 = vor.u32 %v1391, %v1392
      %vm1415 = vcmask 1040384
      %vm1416 = vsmask.f32 256
      %vm1417 = vmand %vm1415, %vm1416
      %v1418 = vsel %vm1417, 0, %v1331
      %v1419 = vsel %vm1417, 0, %v1338
      %v1420 = vsel %vm1417, 0, %v1345
      %v1421 = vsel %vm1417, 0, %v1352
      %v1422 = vsel %vm1417, 0, %v1359
      %v1423 = vsel %vm1417, 0, %v1366
      %v1424 = vsel %vm1417, 0, %v1373
      %v1425 = vsel %vm1417, 0, %v1380
      %v1426 = vsel %vm1417, 0, %v1387
      %v1427 = vsel %vm1417, 0, %v1394
      %v1428 = vsel %vm1417, %v1328, 0
      %v1429 = vsel %vm1417, %v1335, 0
      %v1430 = vsel %vm1417, %v1342, 0
      %v1431 = vsel %vm1417, %v1349, 0
      %v1432 = vsel %vm1417, %v1356, 0
      %v1433 = vsel %vm1417, %v1363, 0
      %v1434 = vsel %vm1417, %v1370, 0
      %v1435 = vsel %vm1417, %v1377, 0
      %v1436 = vsel %vm1417, %v1384, 0
      %v1437 = vsel %vm1417, %v1391, 0
      %v1439 = vshrl.u32 %v1418, 16
      %v1441 = vshll.u32 %v1418, 16
      %v1443 = vrot.slane %v1441, 1
      %v1444 = vor.u32 %v1439, %v1443
      %v1446 = vshll.u32 %v1428, 16
      %v1448 = vrot.slane %v1446, 1
      %v1449 = vsel %vm441, %v1444, %v1448
      %v1451 = vshrl.u32 %v1419, 16
      %v1453 = vshll.u32 %v1419, 16
      %v1455 = vrot.slane %v1453, 1
      %v1456 = vor.u32 %v1451, %v1455
      %v1458 = vshll.u32 %v1429, 16
      %v1460 = vrot.slane %v1458, 1
      %v1461 = vsel %vm441, %v1456, %v1460
      %v1463 = vshrl.u32 %v1420, 16
      %v1465 = vshll.u32 %v1420, 16
      %v1467 = vrot.slane %v1465, 1
      %v1468 = vor.u32 %v1463, %v1467
      %v1470 = vshll.u32 %v1430, 16
      %v1472 = vrot.slane %v1470, 1
      %v1473 = vsel %vm441, %v1468, %v1472
      %v1475 = vshrl.u32 %v1421, 16
      %v1477 = vshll.u32 %v1421, 16
      %v1479 = vrot.slane %v1477, 1
      %v1480 = vor.u32 %v1475, %v1479
      %v1482 = vshll.u32 %v1431, 16
      %v1484 = vrot.slane %v1482, 1
      %v1485 = vsel %vm441, %v1480, %v1484
      %v1487 = vshrl.u32 %v1422, 16
      %v1489 = vshll.u32 %v1422, 16
      %v1491 = vrot.slane %v1489, 1
      %v1492 = vor.u32 %v1487, %v1491
      %v1494 = vshll.u32 %v1432, 16
      %v1496 = vrot.slane %v1494, 1
      %v1497 = vsel %vm441, %v1492, %v1496
      %v1499 = vshrl.u32 %v1423, 16
      %v1501 = vshll.u32 %v1423, 16
      %v1503 = vrot.slane %v1501, 1
      %v1504 = vor.u32 %v1499, %v1503
      %v1506 = vshll.u32 %v1433, 16
      %v1508 = vrot.slane %v1506, 1
      %v1509 = vsel %vm441, %v1504, %v1508
      %v1511 = vshrl.u32 %v1424, 16
      %v1513 = vshll.u32 %v1424, 16
      %v1515 = vrot.slane %v1513, 1
      %v1516 = vor.u32 %v1511, %v1515
      %v1518 = vshll.u32 %v1434, 16
      %v1520 = vrot.slane %v1518, 1
      %v1521 = vsel %vm441, %v1516, %v1520
      %v1523 = vshrl.u32 %v1425, 16
      %v1525 = vshll.u32 %v1425, 16
      %v1527 = vrot.slane %v1525, 1
      %v1528 = vor.u32 %v1523, %v1527
      %v1530 = vshll.u32 %v1435, 16
      %v1532 = vrot.slane %v1530, 1
      %v1533 = vsel %vm441, %v1528, %v1532
      %v1535 = vshrl.u32 %v1426, 16
      %v1537 = vshll.u32 %v1426, 16
      %v1539 = vrot.slane %v1537, 1
      %v1540 = vor.u32 %v1535, %v1539
      %v1542 = vshll.u32 %v1436, 16
      %v1544 = vrot.slane %v1542, 1
      %v1545 = vsel %vm441, %v1540, %v1544
      %v1547 = vshrl.u32 %v1427, 16
      %v1549 = vshll.u32 %v1427, 16
      %v1551 = vrot.slane %v1549, 1
      %v1552 = vor.u32 %v1547, %v1551
      %v1554 = vshll.u32 %v1437, 16
      %v1556 = vrot.slane %v1554, 1
      %v1557 = vsel %vm441, %v1552, %v1556
      %1558 = vrot.lane.b32.xlu0 %v1449, 8
      %v1559 = vpop.permute.xlu0 %1558
      %1560 = vrot.lane.b32.xlu0 %v1461, 8
      %v1561 = vpop.permute.xlu0 %1560
      %1562 = vrot.lane.b32.xlu0 %v1473, 8
      %v1563 = vpop.permute.xlu0 %1562
      %1564 = vrot.lane.b32.xlu0 %v1485, 8
      %v1565 = vpop.permute.xlu0 %1564
      %1566 = vrot.lane.b32.xlu0 %v1497, 8
      %v1567 = vpop.permute.xlu0 %1566
      %1568 = vrot.lane.b32.xlu0 %v1509, 8
      %v1569 = vpop.permute.xlu0 %1568
      %1570 = vrot.lane.b32.xlu0 %v1521, 8
      %v1571 = vpop.permute.xlu0 %1570
      %1572 = vrot.lane.b32.xlu0 %v1533, 8
      %v1573 = vpop.permute.xlu0 %1572
      %1574 = vrot.lane.b32.xlu0 %v1545, 8
      %v1575 = vpop.permute.xlu0 %1574
      %1576 = vrot.lane.b32.xlu0 %v1557, 8
      %v1577 = vpop.permute.xlu0 %1576
      %v1598 = vrot.slane %v1418, 1
      %v1599 = vrot.slane %v1428, 1
      %v1600 = vsel %vm610, %v1598, %v1599
      %v1601 = vrot.slane %v1419, 1
      %v1602 = vrot.slane %v1429, 1
      %v1603 = vsel %vm610, %v1601, %v1602
      %v1604 = vrot.slane %v1420, 1
      %v1605 = vrot.slane %v1430, 1
      %v1606 = vsel %vm610, %v1604, %v1605
      %v1607 = vrot.slane %v1421, 1
      %v1608 = vrot.slane %v1431, 1
      %v1609 = vsel %vm610, %v1607, %v1608
      %v1610 = vrot.slane %v1422, 1
      %v1611 = vrot.slane %v1432, 1
      %v1612 = vsel %vm610, %v1610, %v1611
      %v1613 = vrot.slane %v1423, 1
      %v1614 = vrot.slane %v1433, 1
      %v1615 = vsel %vm610, %v1613, %v1614
      %v1616 = vrot.slane %v1424, 1
      %v1617 = vrot.slane %v1434, 1
      %v1618 = vsel %vm610, %v1616, %v1617
      %v1619 = vrot.slane %v1425, 1
      %v1620 = vrot.slane %v1435, 1
      %v1621 = vsel %vm610, %v1619, %v1620
      %v1622 = vrot.slane %v1426, 1
      %v1623 = vrot.slane %v1436, 1
      %v1624 = vsel %vm610, %v1622, %v1623
      %v1625 = vrot.slane %v1427, 1
      %v1626 = vrot.slane %v1437, 1
      %v1627 = vsel %vm610, %v1625, %v1626
      %1628 = vrot.lane.b32.xlu0 %v1600, 16
      %v1629 = vpop.permute.xlu0 %1628
      %1630 = vrot.lane.b32.xlu0 %v1603, 16
      %v1631 = vpop.permute.xlu0 %1630
      %1632 = vrot.lane.b32.xlu0 %v1606, 16
      %v1633 = vpop.permute.xlu0 %1632
      %1634 = vrot.lane.b32.xlu0 %v1609, 16
      %v1635 = vpop.permute.xlu0 %1634
      %1636 = vrot.lane.b32.xlu0 %v1612, 16
      %v1637 = vpop.permute.xlu0 %1636
      %1638 = vrot.lane.b32.xlu0 %v1615, 16
      %v1639 = vpop.permute.xlu0 %1638
      %1640 = vrot.lane.b32.xlu0 %v1618, 16
      %v1641 = vpop.permute.xlu0 %1640
      %1642 = vrot.lane.b32.xlu0 %v1621, 16
      %v1643 = vpop.permute.xlu0 %1642
      %1644 = vrot.lane.b32.xlu0 %v1624, 16
      %v1645 = vpop.permute.xlu0 %1644
      %1646 = vrot.lane.b32.xlu0 %v1627, 16
      %v1647 = vpop.permute.xlu0 %1646
      %v1649 = vsel %vm671, %v1418, %v1559
      %v1651 = vsel %vm671, %v1419, %v1561
      %v1653 = vsel %vm671, %v1420, %v1563
      %v1655 = vsel %vm671, %v1421, %v1565
      %v1657 = vsel %vm671, %v1422, %v1567
      %v1659 = vsel %vm671, %v1423, %v1569
      %v1661 = vsel %vm671, %v1424, %v1571
      %v1663 = vsel %vm671, %v1425, %v1573
      %v1665 = vsel %vm671, %v1426, %v1575
      %v1667 = vsel %vm671, %v1427, %v1577
      %v1669 = vsel %vm696, %v1649, %v1629
      %v1671 = vsel %vm696, %v1651, %v1631
      %v1673 = vsel %vm696, %v1653, %v1633
      %v1675 = vsel %vm696, %v1655, %v1635
      %v1677 = vsel %vm696, %v1657, %v1637
      %v1679 = vsel %vm696, %v1659, %v1639
      %v1681 = vsel %vm696, %v1661, %v1641
      %v1683 = vsel %vm696, %v1663, %v1643
      %v1685 = vsel %vm696, %v1665, %v1645
      %v1687 = vsel %vm696, %v1667, %v1647
      %v1688 = vld [vmem:[%s4] sm:$0xf]
      %v1689 = vld [vmem:[%s4 + $0x4] sm:$0xf]
      %v1690 = vld [vmem:[%s4 + $0x8] sm:$0xf]
      %s1691 = scalar_lea.vmem %s4, 12
      %v1692 = vld [vmem:[%s1691] sm:$0xf]
      %v1693 = vld [vmem:[%s1691 + $0x4] sm:$0xf]
      %v1694 = vld [vmem:[%s1691 + $0x8] sm:$0xf]
      %v1698 = vunpack.c.l.b16 %v1692
      %v1699 = vunpack.c.l.b16 %v1693
      %v1700 = vunpack.c.l.b16 %v1694
      %v1701 = vpack.c.b16 %v1699, %v1698
      %v1702 = vpack.c.b16 %v1700, %v1700
      %v1704 = vsel %vm737, %v1671, 0
      %v1706 = vsel %vm737, %v1673, 0
      %v1708 = vsel %vm737, %v1675, 0
      %v1710 = vsel %vm737, %v1677, 0
      %v1712 = vsel %vm737, %v1679, 0
      %v1714 = vsel %vm737, %v1681, 0
      %v1716 = vsel %vm737, %v1683, 0
      %v1718 = vsel %vm737, %v1685, 0
      %v1721 = vsel %vm758, %v1702, 0
      %1723 = vmatprep.subr.bf16.mxu0 0
      %1724 = vmatpush1.bf16.msra.mxu0 %v1701
      %1725 = vmatprep.subr.bf16.mxu0 0
      %1726 = vmatpush1.bf16.msra.mxu0 %v1721
      %1727 = vmatprep.subr.bf16.mxu0 0
      %1728 = vmatpush1.bf16.msra.mxu0 0
      %1729 = vmatprep.subr.bf16.mxu0 0
      %1730 = vmatpush1.bf16.msra.mxu0 0
      %1731 = vmatprep.subr.bf16.mxu0 0
      %1732 = vmatpush1.bf16.msra.mxu0 0
      %1733 = vmatprep.subr.bf16.mxu0 0
      %1734 = vmatpush1.bf16.msra.mxu0 0
      %1735 = vmatprep.subr.bf16.mxu0 0
      %1736 = vmatpush1.bf16.msra.mxu0 0
      %1737 = vmatprep.subr.bf16.mxu0 0
      %1738 = vmatpush1.bf16.msra.mxu0 0
      %1739 = vmatprep.subr.bf16.mxu0 0
      %1740 = vmatpush1.bf16.msra.mxu0 0
      %1741 = vmatprep.subr.bf16.mxu0 0
      %1742 = vmatpush1.bf16.msra.mxu0 0
      %1743 = vmatprep.subr.bf16.mxu0 0
      %1744 = vmatpush1.bf16.msra.mxu0 0
      %1745 = vmatprep.subr.bf16.mxu0 0
      %1746 = vmatpush1.bf16.msra.mxu0 0
      %1747 = vmatprep.subr.bf16.mxu0 0
      %1748 = vmatpush1.bf16.msra.mxu0 0
      %1749 = vmatprep.subr.bf16.mxu0 0
      %1750 = vmatpush1.bf16.msra.mxu0 0
      %1751 = vmatprep.subr.bf16.mxu0 0
      %1752 = vmatpush1.bf16.msra.mxu0 0
      %1753 = vmatprep.subr.bf16.mxu0 0
      %1754 = vmatpush1.bf16.msra.mxu0 0
      %1755 = vmatprep.mubr.bf16.mxu0 0
      %1756 = vmatmul.mubr.bf16.gmra.mrb[0].mxu0 %v1704
      %v1757 = vpop.f32.mrb[0].mxu0
      %v1758 = vadd.f32 0.0, %v1757
      %v1759 = vpop.f32.mrb[0].mxu0
      %v1760 = vpop.f32.mrb[0].mxu0
      %v1761 = vadd.f32 0.0, %v1760
      %v1762 = vpop.f32.mrb[0].mxu0
      %1763 = vmatprep.mubr.bf16.mxu0 0
      %1764 = vmatmul.mubr.bf16.gmra.mrb[0].mxu0 %v1706
      %v1765 = vpop.f32.mrb[0].mxu0
      %v1766 = vadd.f32 0.0, %v1765
      %v1767 = vpop.f32.mrb[0].mxu0
      %v1768 = vpop.f32.mrb[0].mxu0
      %v1769 = vadd.f32 0.0, %v1768
      %v1770 = vpop.f32.mrb[0].mxu0
      %1771 = vmatprep.mubr.bf16.mxu0 0
      %1772 = vmatmul.mubr.bf16.gmra.mrb[0].mxu0 %v1708
      %v1773 = vpop.f32.mrb[0].mxu0
      %v1774 = vadd.f32 0.0, %v1773
      %v1775 = vpop.f32.mrb[0].mxu0
      %v1776 = vpop.f32.mrb[0].mxu0
      %v1777 = vadd.f32 0.0, %v1776
      %v1778 = vpop.f32.mrb[0].mxu0
      %1779 = vmatprep.mubr.bf16.mxu0 0
      %1780 = vmatmul.mubr.bf16.gmra.mrb[0].mxu0 %v1710
      %v1781 = vpop.f32.mrb[0].mxu0
      %v1782 = vadd.f32 0.0, %v1781
      %v1783 = vpop.f32.mrb[0].mxu0
      %v1784 = vpop.f32.mrb[0].mxu0
      %v1785 = vadd.f32 0.0, %v1784
      %v1786 = vpop.f32.mrb[0].mxu0
      %1787 = vmatprep.mubr.bf16.mxu0 0
      %1788 = vmatmul.mubr.bf16.gmra.mrb[0].mxu0 %v1712
      %v1789 = vpop.f32.mrb[0].mxu0
      %v1790 = vadd.f32 0.0, %v1789
      %v1791 = vpop.f32.mrb[0].mxu0
      %v1792 = vpop.f32.mrb[0].mxu0
      %v1793 = vadd.f32 0.0, %v1792
      %v1794 = vpop.f32.mrb[0].mxu0
      %1795 = vmatprep.mubr.bf16.mxu0 0
      %1796 = vmatmul.mubr.bf16.gmra.mrb[0].mxu0 %v1714
      %v1797 = vpop.f32.mrb[0].mxu0
      %v1798 = vadd.f32 0.0, %v1797
      %v1799 = vpop.f32.mrb[0].mxu0
      %v1800 = vpop.f32.mrb[0].mxu0
      %v1801 = vadd.f32 0.0, %v1800
      %v1802 = vpop.f32.mrb[0].mxu0
      %1803 = vmatprep.mubr.bf16.mxu0 0
      %1804 = vmatmul.mubr.bf16.gmra.mrb[0].mxu0 %v1716
      %v1805 = vpop.f32.mrb[0].mxu0
      %v1806 = vadd.f32 0.0, %v1805
      %v1807 = vpop.f32.mrb[0].mxu0
      %v1808 = vpop.f32.mrb[0].mxu0
      %v1809 = vadd.f32 0.0, %v1808
      %v1810 = vpop.f32.mrb[0].mxu0
      %1811 = vmatprep.mubr.bf16.mxu0 0
      %1812 = vmatmul.mubr.bf16.gmra.mrb[0].mxu0 %v1718
      %v1813 = vpop.f32.mrb[0].mxu0
      %v1814 = vadd.f32 0.0, %v1813
      %v1815 = vpop.f32.mrb[0].mxu0
      %v1816 = vpop.f32.mrb[0].mxu0
      %v1817 = vadd.f32 0.0, %v1816
      %v1818 = vpop.f32.mrb[0].mxu0
      %1819 = vdwg.mxu0
      %v1823 = vunpack.c.l.b16 %v1688
      %v1824 = vunpack.c.l.b16 %v1689
      %v1825 = vunpack.c.l.b16 %v1690
      %v1826 = vpack.c.b16 %v1824, %v1823
      %v1827 = vpack.c.b16 %v1825, %v1825
      %v1829 = vsel %vm737, %v1669, 0
      %v1832 = vsel %vm758, %v1827, 0
      %1834 = vmatprep.subr.bf16.mxu0 0
      %1835 = vmatpush1.bf16.msra.mxu0 %v1826
      %1836 = vmatprep.subr.bf16.mxu0 0
      %1837 = vmatpush1.bf16.msra.mxu0 %v1832
      %1838 = vmatprep.subr.bf16.mxu0 0
      %1839 = vmatpush1.bf16.msra.mxu0 0
      %1840 = vmatprep.subr.bf16.mxu0 0
      %1841 = vmatpush1.bf16.msra.mxu0 0
      %1842 = vmatprep.subr.bf16.mxu0 0
      %1843 = vmatpush1.bf16.msra.mxu0 0
      %1844 = vmatprep.subr.bf16.mxu0 0
      %1845 = vmatpush1.bf16.msra.mxu0 0
      %1846 = vmatprep.subr.bf16.mxu0 0
      %1847 = vmatpush1.bf16.msra.mxu0 0
      %1848 = vmatprep.subr.bf16.mxu0 0
      %1849 = vmatpush1.bf16.msra.mxu0 0
      %1850 = vmatprep.subr.bf16.mxu0 0
      %1851 = vmatpush1.bf16.msra.mxu0 0
      %1852 = vmatprep.subr.bf16.mxu0 0
      %1853 = vmatpush1.bf16.msra.mxu0 0
      %1854 = vmatprep.subr.bf16.mxu0 0
      %1855 = vmatpush1.bf16.msra.mxu0 0
      %1856 = vmatprep.subr.bf16.mxu0 0
      %1857 = vmatpush1.bf16.msra.mxu0 0
      %1858 = vmatprep.subr.bf16.mxu0 0
      %1859 = vmatpush1.bf16.msra.mxu0 0
      %1860 = vmatprep.subr.bf16.mxu0 0
      %1861 = vmatpush1.bf16.msra.mxu0 0
      %1862 = vmatprep.subr.bf16.mxu0 0
      %1863 = vmatpush1.bf16.msra.mxu0 0
      %1864 = vmatprep.subr.bf16.mxu0 0
      %1865 = vmatpush1.bf16.msra.mxu0 0
      %1866 = vmatprep.mubr.bf16.mxu0 0
      %1867 = vmatmul.mubr.bf16.gmra.mrb[0].mxu0 %v1829
      %v1868 = vpop.f32.mrb[0].mxu0
      %v1869 = vadd.f32 %v1758, %v1868
      %v1870 = vpop.f32.mrb[0].mxu0
      %v1871 = vpop.f32.mrb[0].mxu0
      %v1872 = vadd.f32 %v1761, %v1871
      %v1873 = vpop.f32.mrb[0].mxu0
      %1874 = vmatprep.mubr.bf16.mxu0 0
      %1875 = vmatmul.mubr.bf16.gmra.mrb[0].mxu0 %v1704
      %v1876 = vpop.f32.mrb[0].mxu0
      %v1877 = vadd.f32 %v1766, %v1876
      %v1878 = vpop.f32.mrb[0].mxu0
      %v1879 = vpop.f32.mrb[0].mxu0
      %v1880 = vadd.f32 %v1769, %v1879
      %v1881 = vpop.f32.mrb[0].mxu0
      %1882 = vmatprep.mubr.bf16.mxu0 0
      %1883 = vmatmul.mubr.bf16.gmra.mrb[0].mxu0 %v1706
      %v1884 = vpop.f32.mrb[0].mxu0
      %v1885 = vadd.f32 %v1774, %v1884
      %v1886 = vpop.f32.mrb[0].mxu0
      %v1887 = vpop.f32.mrb[0].mxu0
      %v1888 = vadd.f32 %v1777, %v1887
      %v1889 = vpop.f32.mrb[0].mxu0
      %1890 = vmatprep.mubr.bf16.mxu0 0
      %1891 = vmatmul.mubr.bf16.gmra.mrb[0].mxu0 %v1708
      %v1892 = vpop.f32.mrb[0].mxu0
      %v1893 = vadd.f32 %v1782, %v1892
      %v1894 = vpop.f32.mrb[0].mxu0
      %v1895 = vpop.f32.mrb[0].mxu0
      %v1896 = vadd.f32 %v1785, %v1895
      %v1897 = vpop.f32.mrb[0].mxu0
      %1898 = vmatprep.mubr.bf16.mxu0 0
      %1899 = vmatmul.mubr.bf16.gmra.mrb[0].mxu0 %v1710
      %v1900 = vpop.f32.mrb[0].mxu0
      %v1901 = vadd.f32 %v1790, %v1900
      %v1902 = vpop.f32.mrb[0].mxu0
      %v1903 = vpop.f32.mrb[0].mxu0
      %v1904 = vadd.f32 %v1793, %v1903
      %v1905 = vpop.f32.mrb[0].mxu0
      %1906 = vmatprep.mubr.bf16.mxu0 0
      %1907 = vmatmul.mubr.bf16.gmra.mrb[0].mxu0 %v1712
      %v1908 = vpop.f32.mrb[0].mxu0
      %v1909 = vadd.f32 %v1798, %v1908
      %v1910 = vpop.f32.mrb[0].mxu0
      %v1911 = vpop.f32.mrb[0].mxu0
      %v1912 = vadd.f32 %v1801, %v1911
      %v1913 = vpop.f32.mrb[0].mxu0
      %1914 = vmatprep.mubr.bf16.mxu0 0
      %1915 = vmatmul.mubr.bf16.gmra.mrb[0].mxu0 %v1714
      %v1916 = vpop.f32.mrb[0].mxu0
      %v1917 = vadd.f32 %v1806, %v1916
      %v1918 = vpop.f32.mrb[0].mxu0
      %v1919 = vpop.f32.mrb[0].mxu0
      %v1920 = vadd.f32 %v1809, %v1919
      %v1921 = vpop.f32.mrb[0].mxu0
      %1922 = vmatprep.mubr.bf16.mxu0 0
      %1923 = vmatmul.mubr.bf16.gmra.mrb[0].mxu0 %v1716
      %v1924 = vpop.f32.mrb[0].mxu0
      %v1925 = vadd.f32 %v1814, %v1924
      %v1926 = vpop.f32.mrb[0].mxu0
      %v1927 = vpop.f32.mrb[0].mxu0
      %v1928 = vadd.f32 %v1817, %v1927
      %v1929 = vpop.f32.mrb[0].mxu0
      %1930 = vdwg.mxu0
      %s1931 = scalar_lea.vmem %s4, 24
      %v1932 = vld [vmem:[%s1931] sm:$0xf]
      %v1933 = vld [vmem:[%s1931 + $0x4] sm:$0xf]
      %v1934 = vld [vmem:[%s1931 + $0x8] sm:$0xf]
      %v1938 = vunpack.c.l.b16 %v1932
      %v1939 = vunpack.c.l.b16 %v1933
      %v1940 = vunpack.c.l.b16 %v1934
      %v1941 = vpack.c.b16 %v1939, %v1938
      %v1942 = vpack.c.b16 %v1940, %v1940
      %v1944 = vsel %vm737, %v1687, 0
      %v1947 = vsel %vm758, %v1942, 0
      %1949 = vmatprep.subr.bf16.mxu0 0
      %1950 = vmatpush1.bf16.msra.mxu0 %v1941
      %1951 = vmatprep.subr.bf16.mxu0 0
      %1952 = vmatpush1.bf16.msra.mxu0 %v1947
      %1953 = vmatprep.subr.bf16.mxu0 0
      %1954 = vmatpush1.bf16.msra.mxu0 0
      %1955 = vmatprep.subr.bf16.mxu0 0
      %1956 = vmatpush1.bf16.msra.mxu0 0
      %1957 = vmatprep.subr.bf16.mxu0 0
      %1958 = vmatpush1.bf16.msra.mxu0 0
      %1959 = vmatprep.subr.bf16.mxu0 0
      %1960 = vmatpush1.bf16.msra.mxu0 0
      %1961 = vmatprep.subr.bf16.mxu0 0
      %1962 = vmatpush1.bf16.msra.mxu0 0
      %1963 = vmatprep.subr.bf16.mxu0 0
      %1964 = vmatpush1.bf16.msra.mxu0 0
      %1965 = vmatprep.subr.bf16.mxu0 0
      %1966 = vmatpush1.bf16.msra.mxu0 0
      %1967 = vmatprep.subr.bf16.mxu0 0
      %1968 = vmatpush1.bf16.msra.mxu0 0
      %1969 = vmatprep.subr.bf16.mxu0 0
      %1970 = vmatpush1.bf16.msra.mxu0 0
      %1971 = vmatprep.subr.bf16.mxu0 0
      %1972 = vmatpush1.bf16.msra.mxu0 0
      %1973 = vmatprep.subr.bf16.mxu0 0
      %1974 = vmatpush1.bf16.msra.mxu0 0
      %1975 = vmatprep.subr.bf16.mxu0 0
      %1976 = vmatpush1.bf16.msra.mxu0 0
      %1977 = vmatprep.subr.bf16.mxu0 0
      %1978 = vmatpush1.bf16.msra.mxu0 0
      %1979 = vmatprep.subr.bf16.mxu0 0
      %1980 = vmatpush1.bf16.msra.mxu0 0
      %1981 = vmatprep.mubr.bf16.mxu0 0
      %1982 = vmatmul.mubr.bf16.gmra.mrb[0].mxu0 %v1706
      %v1983 = vpop.f32.mrb[0].mxu0
      %v1984 = vadd.f32 0.0, %v1983
      %v1985 = vpop.f32.mrb[0].mxu0
      %v1986 = vpop.f32.mrb[0].mxu0
      %v1987 = vadd.f32 0.0, %v1986
      %v1988 = vpop.f32.mrb[0].mxu0
      %1989 = vmatprep.mubr.bf16.mxu0 0
      %1990 = vmatmul.mubr.bf16.gmra.mrb[0].mxu0 %v1708
      %v1991 = vpop.f32.mrb[0].mxu0
      %v1992 = vadd.f32 0.0, %v1991
      %v1993 = vpop.f32.mrb[0].mxu0
      %v1994 = vpop.f32.mrb[0].mxu0
      %v1995 = vadd.f32 0.0, %v1994
      %v1996 = vpop.f32.mrb[0].mxu0
      %1997 = vmatprep.mubr.bf16.mxu0 0
      %1998 = vmatmul.mubr.bf16.gmra.mrb[0].mxu0 %v1710
      %v1999 = vpop.f32.mrb[0].mxu0
      %v2000 = vadd.f32 0.0, %v1999
      %v2001 = vpop.f32.mrb[0].mxu0
      %v2002 = vpop.f32.mrb[0].mxu0
      %v2003 = vadd.f32 0.0, %v2002
      %v2004 = vpop.f32.mrb[0].mxu0
      %2005 = vmatprep.mubr.bf16.mxu0 0
      %2006 = vmatmul.mubr.bf16.gmra.mrb[0].mxu0 %v1712
      %v2007 = vpop.f32.mrb[0].mxu0
      %v2008 = vadd.f32 0.0, %v2007
      %v2009 = vpop.f32.mrb[0].mxu0
      %v2010 = vpop.f32.mrb[0].mxu0
      %v2011 = vadd.f32 0.0, %v2010
      %v2012 = vpop.f32.mrb[0].mxu0
      %2013 = vmatprep.mubr.bf16.mxu0 0
      %2014 = vmatmul.mubr.bf16.gmra.mrb[0].mxu0 %v1714
      %v2015 = vpop.f32.mrb[0].mxu0
      %v2016 = vadd.f32 0.0, %v2015
      %v2017 = vpop.f32.mrb[0].mxu0
      %v2018 = vpop.f32.mrb[0].mxu0
      %v2019 = vadd.f32 0.0, %v2018
      %v2020 = vpop.f32.mrb[0].mxu0
      %2021 = vmatprep.mubr.bf16.mxu0 0
      %2022 = vmatmul.mubr.bf16.gmra.mrb[0].mxu0 %v1716
      %v2023 = vpop.f32.mrb[0].mxu0
      %v2024 = vadd.f32 0.0, %v2023
      %v2025 = vpop.f32.mrb[0].mxu0
      %v2026 = vpop.f32.mrb[0].mxu0
      %v2027 = vadd.f32 0.0, %v2026
      %v2028 = vpop.f32.mrb[0].mxu0
      %2029 = vmatprep.mubr.bf16.mxu0 0
      %2030 = vmatmul.mubr.bf16.gmra.mrb[0].mxu0 %v1718
      %v2031 = vpop.f32.mrb[0].mxu0
      %v2032 = vadd.f32 0.0, %v2031
      %v2033 = vpop.f32.mrb[0].mxu0
      %v2034 = vpop.f32.mrb[0].mxu0
      %v2035 = vadd.f32 0.0, %v2034
      %v2036 = vpop.f32.mrb[0].mxu0
      %2037 = vmatprep.mubr.bf16.mxu0 0
      %2038 = vmatmul.mubr.bf16.gmra.mrb[0].mxu0 %v1944
      %v2039 = vpop.f32.mrb[0].mxu0
      %v2040 = vadd.f32 0.0, %v2039
      %v2041 = vpop.f32.mrb[0].mxu0
      %v2042 = vpop.f32.mrb[0].mxu0
      %v2043 = vadd.f32 0.0, %v2042
      %v2044 = vpop.f32.mrb[0].mxu0
      %2045 = vdwg.mxu0
      %v2046 = vadd.f32 %v1869, %v1984
      %v2047 = vadd.f32 %v1872, %v1987
      %v2048 = vadd.f32 %v1877, %v1992
      %v2049 = vadd.f32 %v1880, %v1995
      %v2050 = vadd.f32 %v1885, %v2000
      %v2051 = vadd.f32 %v1888, %v2003
      %v2052 = vadd.f32 %v1893, %v2008
      %v2053 = vadd.f32 %v1896, %v2011
      %v2054 = vadd.f32 %v1901, %v2016
      %v2055 = vadd.f32 %v1904, %v2019
      %v2056 = vadd.f32 %v1909, %v2024
      %v2057 = vadd.f32 %v1912, %v2027
      %v2058 = vadd.f32 %v1917, %v2032
      %v2059 = vadd.f32 %v1920, %v2035
      %v2060 = vadd.f32 %v1925, %v2040
      %v2061 = vadd.f32 %v1928, %v2043
      %v2062 = vld [vmem:[%s5] sm:$0x1]
      %v2064 = vlaneseq
      %v2065 = vshrl.u32 %v2064, 7
      %v2066 = vsub.s32 0, %v2065
      %v2067 = vrot.slane %v2062, %v2066
      %v2069 = vmul.f32 %v2046, %v2067
      %v2070 = vmul.f32 %v2047, %v2067
      %v2071 = vmul.f32 %v2048, %v2067
      %v2072 = vmul.f32 %v2049, %v2067
      %v2073 = vmul.f32 %v2050, %v2067
      %v2074 = vmul.f32 %v2051, %v2067
      %v2075 = vmul.f32 %v2052, %v2067
      %v2076 = vmul.f32 %v2053, %v2067
      %v2077 = vmul.f32 %v2054, %v2067
      %v2078 = vmul.f32 %v2055, %v2067
      %v2079 = vmul.f32 %v2056, %v2067
      %v2080 = vmul.f32 %v2057, %v2067
      %v2081 = vmul.f32 %v2058, %v2067
      %v2082 = vmul.f32 %v2059, %v2067
      %v2083 = vmul.f32 %v2060, %v2067
      %v2084 = vmul.f32 %v2061, %v2067
      %v2085 = vld [vmem:[%s6] sm:$0x1]
      %v2087 = vlaneseq
      %v2088 = vshrl.u32 %v2087, 7
      %v2089 = vsub.s32 0, %v2088
      %v2090 = vrot.slane %v2085, %v2089
      %v2092 = vadd.f32 %v2069, %v2090
      %v2093 = vadd.f32 %v2070, %v2090
      %v2094 = vadd.f32 %v2071, %v2090
      %v2095 = vadd.f32 %v2072, %v2090
      %v2096 = vadd.f32 %v2073, %v2090
      %v2097 = vadd.f32 %v2074, %v2090
      %v2098 = vadd.f32 %v2075, %v2090
      %v2099 = vadd.f32 %v2076, %v2090
      %v2100 = vadd.f32 %v2077, %v2090
      %v2101 = vadd.f32 %v2078, %v2090
      %v2102 = vadd.f32 %v2079, %v2090
      %v2103 = vadd.f32 %v2080, %v2090
      %v2104 = vadd.f32 %v2081, %v2090
      %v2105 = vadd.f32 %v2082, %v2090
      %v2106 = vadd.f32 %v2083, %v2090
      %v2107 = vadd.f32 %v2084, %v2090
      %v2108 = vunpack.c.l.bf16 %v315
      %v2109 = vunpack.c.l.bf16 %v316
      %v2110 = vunpack.c.l.bf16 %v317
      %v2111 = vunpack.c.l.bf16 %v318
      %v2112 = vunpack.c.l.bf16 %v319
      %v2113 = vunpack.c.l.bf16 %v320
      %v2114 = vunpack.c.l.bf16 %v321
      %v2115 = vunpack.c.l.bf16 %v322
      %v2116 = vunpack.c.l.bf16 %v323
      %v2117 = vunpack.c.l.bf16 %v324
      %v2118 = vunpack.c.l.bf16 %v325
      %v2119 = vunpack.c.l.bf16 %v326
      %v2120 = vunpack.c.l.bf16 %v327
      %v2121 = vunpack.c.l.bf16 %v328
      %v2122 = vunpack.c.l.bf16 %v329
      %v2123 = vunpack.c.l.bf16 %v330
      %v2124 = vunpack.c.l.bf16 %v331
      %v2125 = vunpack.c.l.bf16 %v332
      %v2126 = vunpack.c.l.bf16 %v333
      %v2127 = vunpack.c.l.bf16 %v334
      %v2128 = vunpack.c.l.bf16 %v335
      %v2129 = vunpack.c.l.bf16 %v336
      %v2130 = vunpack.c.l.bf16 %v337
      %v2131 = vunpack.c.l.bf16 %v338
      %vm2156 = vcmask 1046528
      %v2157 = vrot.slane %v2108, 1
      %v2158 = vrot.slane %v2109, 1
      %v2159 = vsel %vm2156, %v2157, %v2158
      %v2160 = vrot.slane %v2110, 1
      %v2161 = vsel %vm2156, %v2158, %v2160
      %v2162 = vrot.slane %v2111, 1
      %v2163 = vrot.slane %v2112, 1
      %v2164 = vsel %vm2156, %v2162, %v2163
      %v2165 = vrot.slane %v2113, 1
      %v2166 = vsel %vm2156, %v2163, %v2165
      %v2167 = vrot.slane %v2114, 1
      %v2168 = vrot.slane %v2115, 1
      %v2169 = vsel %vm2156, %v2167, %v2168
      %v2170 = vrot.slane %v2116, 1
      %v2171 = vsel %vm2156, %v2168, %v2170
      %v2172 = vrot.slane %v2117, 1
      %v2173 = vrot.slane %v2118, 1
      %v2174 = vsel %vm2156, %v2172, %v2173
      %v2175 = vrot.slane %v2119, 1
      %v2176 = vsel %vm2156, %v2173, %v2175
      %v2177 = vrot.slane %v2120, 1
      %v2178 = vrot.slane %v2121, 1
      %v2179 = vsel %vm2156, %v2177, %v2178
      %v2180 = vrot.slane %v2122, 1
      %v2181 = vsel %vm2156, %v2178, %v2180
      %v2182 = vrot.slane %v2123, 1
      %v2183 = vrot.slane %v2124, 1
      %v2184 = vsel %vm2156, %v2182, %v2183
      %v2185 = vrot.slane %v2125, 1
      %v2186 = vsel %vm2156, %v2183, %v2185
      %v2187 = vrot.slane %v2126, 1
      %v2188 = vrot.slane %v2127, 1
      %v2189 = vsel %vm2156, %v2187, %v2188
      %v2190 = vrot.slane %v2128, 1
      %v2191 = vsel %vm2156, %v2188, %v2190
      %v2192 = vrot.slane %v2129, 1
      %v2193 = vrot.slane %v2130, 1
      %v2194 = vsel %vm2156, %v2192, %v2193
      %v2195 = vrot.slane %v2131, 1
      %v2196 = vsel %vm2156, %v2193, %v2195
      %v2213 = vadd.f32 %v2092, %v2159
      %v2214 = vadd.f32 %v2093, %v2161
      %v2215 = vadd.f32 %v2094, %v2164
      %v2216 = vadd.f32 %v2095, %v2166
      %v2217 = vadd.f32 %v2096, %v2169
      %v2218 = vadd.f32 %v2097, %v2171
      %v2219 = vadd.f32 %v2098, %v2174
      %v2220 = vadd.f32 %v2099, %v2176
      %v2221 = vadd.f32 %v2100, %v2179
      %v2222 = vadd.f32 %v2101, %v2181
      %v2223 = vadd.f32 %v2102, %v2184
      %v2224 = vadd.f32 %v2103, %v2186
      %v2225 = vadd.f32 %v2104, %v2189
      %v2226 = vadd.f32 %v2105, %v2191
      %v2227 = vadd.f32 %v2106, %v2194
      %v2228 = vadd.f32 %v2107, %v2196
      %v2229 = vmax.f32 %v2213, 0.0
      %v2230 = vmax.f32 %v2214, 0.0
      %v2231 = vmax.f32 %v2215, 0.0
      %v2232 = vmax.f32 %v2216, 0.0
      %v2233 = vmax.f32 %v2217, 0.0
      %v2234 = vmax.f32 %v2218, 0.0
      %v2235 = vmax.f32 %v2219, 0.0
      %v2236 = vmax.f32 %v2220, 0.0
      %v2237 = vmax.f32 %v2221, 0.0
      %v2238 = vmax.f32 %v2222, 0.0
      %v2239 = vmax.f32 %v2223, 0.0
      %v2240 = vmax.f32 %v2224, 0.0
      %v2241 = vmax.f32 %v2225, 0.0
      %v2242 = vmax.f32 %v2226, 0.0
      %v2243 = vmax.f32 %v2227, 0.0
      %v2244 = vmax.f32 %v2228, 0.0
      %2245 = vst.msk [vmem:[%s302] sm:$0xff] %vm671, %v2229
      %2246 = vst.msk [vmem:[%s302 + $0x8] sm:$0xff] %vm671, %v2230
      %2247 = vst.msk [vmem:[%s302 + $0x10] sm:$0xff] %vm671, %v2231
      %2248 = vst.msk [vmem:[%s302 + $0x18] sm:$0xff] %vm671, %v2232
      %2249 = vst.msk [vmem:[%s302 + $0x20] sm:$0xff] %vm671, %v2233
      %2250 = vst.msk [vmem:[%s302 + $0x28] sm:$0xff] %vm671, %v2234
      %2251 = vst.msk [vmem:[%s302 + $0x30] sm:$0xff] %vm671, %v2235
      %2252 = vst.msk [vmem:[%s302 + $0x38] sm:$0xff] %vm671, %v2236
      %2253 = vst.msk [vmem:[%s302 + $0x40] sm:$0xff] %vm671, %v2237
      %2254 = vst.msk [vmem:[%s302 + $0x48] sm:$0xff] %vm671, %v2238
      %2255 = vst.msk [vmem:[%s302 + $0x50] sm:$0xff] %vm671, %v2239
      %2256 = vst.msk [vmem:[%s302 + $0x58] sm:$0xff] %vm671, %v2240
      %2257 = vst.msk [vmem:[%s302 + $0x60] sm:$0xff] %vm671, %v2241
      %2258 = vst.msk [vmem:[%s302 + $0x68] sm:$0xff] %vm671, %v2242
      %2259 = vst.msk [vmem:[%s302 + $0x70] sm:$0xff] %vm671, %v2243
      %2260 = vst.msk [vmem:[%s302 + $0x78] sm:$0xff] %vm671, %v2244
      %s2261 = smul.u32 8, %s23
      %p2262 = scmp.lt.s32.totalorder %s22, 1
      %s2263 = scalar_select %p2262, %s22, 1
      %p2264 = scmp.lt.s32.totalorder %s2261, 15
      %s2265 = scalar_select %p2264, %s2261, 15
      %s2266 = smul.addr %s2265, 2
      %s2267 = smul.addr %s2263, 32
      %s2268 = sadd.s32 %s2266, %s2267
      %s2269 = smul.addr %s2268, 8
      %s2270 = scalar_lea.vmem %s7, %s2269
      // Predicated region
      $region49: #{tpu_custom_call.1} parent=47 // pred_check
        %p2271 = pneg %p202
      $region50: #{tpu_custom_call.1} parent=47 // pred_check_branch
        %2273 = sbr.rel (%p2271) target = $region52
      $region51: #{tpu_custom_call.1} parent=47 // pred_region
        %s2274 = smul.u32 8, %s23
      $region52: #{tpu_custom_call.1} parent=47 // pred_fallthru
        _
    $region48: #{tpu_custom_call.1} parent=5 // pred_fallthru
      _
    %p2275 = scmp.le.s32.totalorder 2, %s13
    // Predicated region
    $region53: #{tpu_custom_call.1} parent=5 // pred_check
      %p2276 = pneg %p2275
    $region54: #{tpu_custom_call.1} parent=5 // pred_check_branch
      %2278 = sbr.rel (%p2276) target = $region56
    $region55: #{tpu_custom_call.1} parent=5 // pred_region
      %s2279 = ssub.s32 %s13, 2
      // Predicated region
      $region57: #{tpu_custom_call.1} parent=55 // pred_check
        %p2280 = pneg %p208
      $region58: #{tpu_custom_call.1} parent=55 // pred_check_branch
        %2282 = sbr.rel (%p2280) target = $region60
      $region59: #{tpu_custom_call.1} parent=55 // pred_region
        %s2283 = smul.u32 8, %s25
        %p2284 = scmp.lt.s32.totalorder %s24, 1
        %s2285 = scalar_select %p2284, %s24, 1
        %p2286 = scmp.lt.s32.totalorder %s2283, 15
        %s2287 = scalar_select %p2286, %s2283, 15
        %s2288 = smul.addr %s2287, 2
        %s2289 = smul.addr %s2285, 32
        %s2290 = sadd.s32 %s2288, %s2289
        %s2291 = smul.addr %s2290, 8
        %s2292 = scalar_lea.vmem %s7, %s2291
      $region60: #{tpu_custom_call.1} parent=55 // pred_fallthru
        _
    $region56: #{tpu_custom_call.1} parent=5 // pred_fallthru
      _
  $region6: #{tpu_custom_call.1} parent=0 // loop_footer
    %s17 = sadd.s32 1, %s13
  $region7: #{tpu_custom_call.1} parent=0 // loop_footer_branch
    %12 = sbr.rel target = $region3
  $region8: #{tpu_custom_call.1} parent=0 // loop_exit
    _

</llo_original>
